<compile_context>
chip_gen: v7x
topology: tpu7x:2x2x1
jax: 0.10.0
libtpu: 0.0.40
codegen_flags: <defaults>
</compile_context>

<pallas_src>
import functools

import jax
import jax.numpy as jnp
from jax.experimental import pallas as pl
from jax.experimental.pallas import tpu as pltpu


# -----------------------------------------------------------------------------
# Kernel 1: embedding gather + Bahdanau attention + fused GRU step
# -----------------------------------------------------------------------------
def state_kernel(
    ids_ref,            # SMEM  [B] int32 token ids
    emb_tbl_hbm,        # HBM   [V, EMB] embedding table (never loaded whole)
    hid_ref,            # VMEM  [B, H]
    enc_ref,            # VMEM  [B, S, E]   (single copy of the encoder outputs)
    wa_h_ref,           # [H, H]
    wa_e_ref,           # [E, H]
    ba_ref,             # [1, H]
    va_ref,             # [1, H]
    wih_ref,            # [EMB+E, 3H]  fused GRU input weight
    whh_ref,            # [H,     3H]
    bih_ref,            # [1, 3H]
    bhh_ref,            # [1, 3H]
    # outputs
    xcat_ref,           # [B, H+E+EMB]  bf16, fc_out activation = cat(h_new, weighted, emb)
    hid_out_ref,        # [B, H]        f32
    attn_ref,           # [B, S]        f32
    # scratch
    emb_buf,            # VMEM [B, EMB] f32 (gathered rows; table is f32 so no direct bf16 DMA)
    dma_sem,            # DMA sems (B,)
):
    B, S, E = enc_ref.shape
    H = hid_ref.shape[1]
    f32 = jnp.float32

    # ---- embedding gather: issue one row DMA per batch element NOW, wait later ----
    copies = []
    for b in range(B):  # static unroll, B is tiny
        cp = pltpu.make_async_copy(
            emb_tbl_hbm.at[ids_ref[b]], emb_buf.at[b], dma_sem.at[b])
        cp.start()
        copies.append(cp)

    hid = hid_ref[...]                                   # [B, H]
    enc = enc_ref[...]                                    # [B, S, E]
    enc_flat = enc.reshape(B * S, E)                      # lane dim unchanged (cheap relayout)

    # ---- Bahdanau attention: energy = tanh([hid ; enc] @ Wa^T + ba); score = energy.v
    hid_part = jnp.dot(hid, wa_h_ref[...], preferred_element_type=f32)        # [B, H]
    enc_part = jnp.dot(enc_flat, wa_e_ref[...], preferred_element_type=f32)   # [B*S, H]
    energy = jnp.tanh(enc_part.reshape(B, S, H)
                      + hid_part[:, None, :]
                      + ba_ref[...][None, :, :])                              # [B, S, H]
    scores = jnp.sum(energy * va_ref[...][None, :, :], axis=-1)               # [B, S]

    # softmax over source positions (reciprocal on the otherwise-idle EUP)
    m = jnp.max(scores, axis=-1, keepdims=True)
    ex = jnp.exp(scores - m)
    a = ex * pl.reciprocal(jnp.sum(ex, axis=-1, keepdims=True), approx=True)
    attn_ref[...] = a

    # weighted context (bmm in PyTorch): [B, E]
    weighted = jnp.sum(a[:, :, None] * enc, axis=1)

    # ---- the GRU needs the embedded rows: wait on the overlapped DMAs now ----
    for cp in copies:
        cp.wait()
    emb = emb_buf[...]                                    # [B, EMB] (dropout = identity)

    # ---- fused single-step GRU, x = cat(embedded, weighted), gates stacked r|z|n ----
    x_gru = jnp.concatenate([emb, weighted], axis=1)                          # [B, EMB+E]
    gi = jnp.dot(x_gru, wih_ref[...], preferred_element_type=f32) + bih_ref[...]
    gh = jnp.dot(hid, whh_ref[...], preferred_element_type=f32) + bhh_ref[...]
    r = jax.nn.sigmoid(gi[:, :H] + gh[:, :H])
    z = jax.nn.sigmoid(gi[:, H:2 * H] + gh[:, H:2 * H])
    n = jnp.tanh(gi[:, 2 * H:] + r * gh[:, 2 * H:])
    h_new = (1.0 - z) * n + z * hid
    hid_out_ref[...] = h_new

    # fc_out activation, cast ONCE to bf16 (MXU operand dtype for the vocab projection)
    xcat_ref[...] = jnp.concatenate([h_new, weighted, emb], axis=1).astype(jnp.bfloat16)


# -----------------------------------------------------------------------------
# Kernel 2: vocab projection, streamed over large lane-dense vocab tiles
# -----------------------------------------------------------------------------
def fc_kernel(x_ref, w_ref, b_ref, pred_ref):
    # One wide MXU contraction per vocab tile: bf16 operands, f32 accumulate.
    pred_ref[...] = (jnp.dot(x_ref[...], w_ref[...], preferred_element_type=jnp.float32)
                     + b_ref[...])


# -----------------------------------------------------------------------------
# One-time weight packing (no per-step transposes / splits / casts in HBM)
# -----------------------------------------------------------------------------
def _round_up(x, m):
    return (x + m - 1) // m * m


def _cdiv(a, b):
    return (a + b - 1) // b


def pack_params(params, tile_v=8192, min_tiles=2):
    """tile_v defaults large (weight streaming is HBM-bound; amortize grid-step
    overhead) but we keep at least `min_tiles` tiles so v7x's two TensorCores both
    get work when the vocab allows it."""
    emb_table = params["embedding"].astype(jnp.float32)            # [V, EMB]
    V, EMB = emb_table.shape
    w_attn = params["w_attn"]
    H = w_attn.shape[0]
    w_ih, w_hh = params["w_ih"], params["w_hh"]

    # ---- choose vocab tiling ----
    V_lane = _round_up(V, 128)
    n_tiles = max(_cdiv(V_lane, tile_v), min_tiles)
    tile_v = _round_up(_cdiv(V_lane, n_tiles), 128)
    V_pad = tile_v * _cdiv(V_lane, tile_v)

    w_fc_t = params["w_fc"].T.astype(jnp.bfloat16)                 # [H+E+EMB, V] bf16
    b_fc = params["b_fc"].astype(jnp.float32)
    if V_pad != V:
        w_fc_t = jnp.pad(w_fc_t, ((0, 0), (0, V_pad - V)))
        b_fc = jnp.pad(b_fc, (0, V_pad - V))

    packed = {
        "emb_table": emb_table,
        # attention: Linear(H+E -> H), cat order (hidden, encoder_outputs)
        "wa_h": w_attn[:, :H].T,                  # [H, H]
        "wa_e": w_attn[:, H:].T,                  # [E, H]
        "ba":   params["b_attn"][None, :],        # [1, H]
        "va":   params["v_attn"][None, :],        # [1, H]
        # GRU: input = cat(embedded, weighted); gates stacked r|z|n along 3H
        "wih":  w_ih.T,                           # [EMB+E, 3H]  (fused input contraction)
        "whh":  w_hh.T,                           # [H,     3H]
        "bih":  params["b_ih"][None, :],          # [1, 3H]
        "bhh":  params["b_hh"][None, :],          # [1, 3H]
        # fc_out: Linear(H+E+EMB -> V), cat order (output, weighted, embedded)
        "wfc_t": w_fc_t,                          # [H+E+EMB, V_pad]  bf16
        "bfc":   b_fc[None, :],                   # [1, V_pad]        f32
    }
    return packed, tile_v


# -----------------------------------------------------------------------------
# Forward wrapper
# -----------------------------------------------------------------------------
@functools.partial(jax.jit, static_argnames=("tile_v",))
def decoder_forward(input_ids, hidden, encoder_outputs, packed, *, tile_v):
    """input_ids [B] int32, hidden [B,H] f32, encoder_outputs [S,B,E] f32 (PyTorch layout)."""
    B = input_ids.shape[0]
    S, _, E = encoder_outputs.shape
    H = hidden.shape[1]
    V, EMB = packed["emb_table"].shape
    D_in, V_pad = packed["wfc_t"].shape

    # source-major -> batch-major once in the wrapper (tiny tensor, done by XLA)
    enc3 = jnp.transpose(encoder_outputs, (1, 0, 2))      # [B, S, E]

    vmem = pl.BlockSpec(memory_space=pltpu.MemorySpace.VMEM)
    x_cat, h_new, attn = pl.pallas_call(
        state_kernel,
        out_shape=(
            jax.ShapeDtypeStruct((B, D_in), jnp.bfloat16),   # cat(h_new, weighted, emb)
            jax.ShapeDtypeStruct((B, H), jnp.float32),
            jax.ShapeDtypeStruct((B, S), jnp.float32),
        ),
        in_specs=[pl.BlockSpec(memory_space=pltpu.MemorySpace.SMEM),  # token ids (scalars)
                  pl.BlockSpec(memory_space=pl.ANY)]                  # embedding table in HBM
                 + [vmem] * 10,
        out_specs=(vmem, vmem, vmem),
        scratch_shapes=[pltpu.VMEM((B, EMB), jnp.float32),
                        pltpu.SemaphoreType.DMA((B,))],
    )(input_ids, packed["emb_table"], hidden, enc3,
      packed["wa_h"], packed["wa_e"], packed["ba"], packed["va"],
      packed["wih"], packed["whh"], packed["bih"], packed["bhh"])

    # vocab projection: stream W_fc through double-buffered bf16 tiles
    num_tiles = V_pad // tile_v
    # scoped-VMEM budget: double-buffered weight + bias + output tiles, resident x_cat
    est_bytes = (2 * (D_in * tile_v * 2 + tile_v * 4 + B * tile_v * 4)
                 + B * D_in * 2 + (2 << 20))
    vmem_limit = int(min(max(est_bytes, 16 << 20), 64 << 20))
    pred = pl.pallas_call(
        fc_kernel,
        grid=(num_tiles,),
        in_specs=[
            pl.BlockSpec((B, D_in), lambda i: (0, 0)),        # resident bf16 activations
            pl.BlockSpec((D_in, tile_v), lambda i: (0, i)),   # streamed bf16 weight tile
            pl.BlockSpec((1, tile_v), lambda i: (0, i)),      # streamed bias tile
        ],
        out_specs=pl.BlockSpec((B, tile_v), lambda i: (0, i)),
        out_shape=jax.ShapeDtypeStruct((B, V_pad), jnp.float32),
        compiler_params=pltpu.CompilerParams(
            dimension_semantics=("parallel",),   # vocab tiles shard across v7x's 2 TCs
            vmem_limit_bytes=vmem_limit),
    )(x_cat, packed["wfc_t"], packed["bfc"])

    if V_pad != V:
        pred = pred[:, :V]
    return pred, h_new, attn


# -----------------------------------------------------------------------------
# Parameter init (pretrained pickle replaced by deterministic random table)
# -----------------------------------------------------------------------------
def init_params(key, vocab, emb_dim, enc_hid, dec_hid):
    E = 2 * enc_hid
    H = dec_hid
    ks = jax.random.split(key, 10)
    s = 0.1
    return {
        "embedding": jax.random.normal(ks[0], (vocab, emb_dim), jnp.float32) * s,
        "w_attn":    jax.random.normal(ks[1], (H, H + E), jnp.float32) * s,
        "b_attn":    jax.random.normal(ks[2], (H,), jnp.float32) * s,
        "v_attn":    jax.random.normal(ks[3], (H,), jnp.float32) * s,
        "w_ih":      jax.random.normal(ks[4], (3 * H, emb_dim + E), jnp.float32) * s,
        "w_hh":      jax.random.normal(ks[5], (3 * H, H), jnp.float32) * s,
        "b_ih":      jax.random.normal(ks[6], (3 * H,), jnp.float32) * s,
        "b_hh":      jax.random.normal(ks[7], (3 * H,), jnp.float32) * s,
        "w_fc":      jax.random.normal(ks[8], (vocab, H + E + emb_dim), jnp.float32) * s,
        "b_fc":      jax.random.normal(ks[9], (vocab,), jnp.float32) * s,
    }


def _reference_forward(input_ids, hidden, encoder_outputs, params):
    """Pure-JAX reference of the same Decoder forward (f32 everywhere)."""
    with jax.default_matmul_precision("highest"):
        emb = params["embedding"][input_ids]
        enc = jnp.transpose(encoder_outputs, (1, 0, 2))           # [B, S, E]
        B, S, _ = enc.shape
        H = hidden.shape[1]
        hid_rep = jnp.broadcast_to(hidden[:, None, :], (B, S, H))
        energy = jnp.tanh(
            jnp.concatenate([hid_rep, enc], axis=-1) @ params["w_attn"].T
            + params["b_attn"])
        scores = jnp.einsum("bsh,h->bs", energy, params["v_attn"])
        a = jax.nn.softmax(scores, axis=-1)
        weighted = jnp.einsum("bs,bse->be", a, enc)
        x = jnp.concatenate([emb, weighted], axis=1)
        gi = x @ params["w_ih"].T + params["b_ih"]
        gh = hidden @ params["w_hh"].T + params["b_hh"]
        r = jax.nn.sigmoid(gi[:, :H] + gh[:, :H])
        z = jax.nn.sigmoid(gi[:, H:2 * H] + gh[:, H:2 * H])
        n = jnp.tanh(gi[:, 2 * H:] + r * gh[:, 2 * H:])
        h_new = (1.0 - z) * n + z * hidden
        pred = (jnp.concatenate([h_new, weighted, emb], axis=1) @ params["w_fc"].T
                + params["b_fc"])
    return pred, h_new, a


if __name__ == "__main__":
    B, S = 2, 8
    EMB, ENC_HID, DEC_HID, VOCAB = 32, 32, 32, 1024
    E = 2 * ENC_HID

    key = jax.random.PRNGKey(0)
    kp, k1, k2, k3 = jax.random.split(key, 4)
    params = init_params(kp, VOCAB, EMB, ENC_HID, DEC_HID)
    # production default tile_v=8192; the tiny demo vocab is split into 2 lane-dense
    # 512-wide tiles so both v7x TensorCores still get one vocab tile each.
    packed, tile_v = pack_params(params)

    input_ids = jax.random.randint(k1, (B,), 0, VOCAB, dtype=jnp.int32)   # [B]
    hidden = jax.random.normal(k2, (B, DEC_HID), jnp.float32)             # [B, H]
    encoder_outputs = jax.random.normal(k3, (S, B, E), jnp.float32)       # [S, B, 2*enc_hid]

    pred, h_new, attn = decoder_forward(
        input_ids, hidden, encoder_outputs, packed, tile_v=tile_v)
    jax.block_until_ready((pred, h_new, attn))

    assert pred.shape == (B, VOCAB)
    assert h_new.shape == (B, DEC_HID)
    assert attn.shape == (B, S)
    assert bool(jnp.all(jnp.isfinite(pred)))
    assert bool(jnp.all(jnp.isfinite(h_new)))

    # light correctness check vs. pure-JAX reference (bf16 fc weights/activations +
    # approx softmax reciprocal introduce small, bounded numeric differences)
    ref_pred, ref_h, ref_a = _reference_forward(input_ids, hidden, encoder_outputs, params)
    assert bool(jnp.max(jnp.abs(attn - ref_a)) < 5e-3)
    assert bool(jnp.max(jnp.abs(h_new - ref_h)) < 5e-3)
    assert bool(jnp.max(jnp.abs(pred - ref_pred)) < 5e-2)

    print("KERNEL_OK")
</pallas_src>

<mosaic_0001>
module attributes {stable_mosaic.version = 11 : i64} {
  func.func @state_kernel(%arg0: memref<2xi32, #tpu.memory_space<smem>>, %arg1: memref<1024x32xf32, #tpu.memory_space<any>>, %arg2: memref<2x32xf32, #tpu.memory_space<vmem>>, %arg3: memref<2x8x64xf32, #tpu.memory_space<vmem>>, %arg4: memref<32x32xf32, #tpu.memory_space<vmem>>, %arg5: memref<64x32xf32, #tpu.memory_space<vmem>>, %arg6: memref<1x32xf32, #tpu.memory_space<vmem>>, %arg7: memref<1x32xf32, #tpu.memory_space<vmem>>, %arg8: memref<96x96xf32, #tpu.memory_space<vmem>>, %arg9: memref<32x96xf32, #tpu.memory_space<vmem>>, %arg10: memref<1x96xf32, #tpu.memory_space<vmem>>, %arg11: memref<1x96xf32, #tpu.memory_space<vmem>>, %arg12: memref<2x128xbf16, #tpu.memory_space<vmem>>, %arg13: memref<2x32xf32, #tpu.memory_space<vmem>>, %arg14: memref<2x8xf32, #tpu.memory_space<vmem>>, %arg15: memref<2x32xf32, #tpu.memory_space<vmem>>, %arg16: memref<2x!tpu.dma_semaphore, #tpu.memory_space<semaphore_mem>>) attributes {dimension_semantics = [], scalar_prefetch = 0 : i64, scratch_operands = 2 : i64, tpu.core_type = #tpu.core_type<tc>} {
    %c0 = arith.constant 0 : index
    %0 = memref.load %arg0[%c0] : memref<2xi32, #tpu.memory_space<smem>>
    %c0_i32 = arith.constant 0 : i32
    %c0_i32_0 = arith.constant 0 : i32
    %c0_i32_1 = arith.constant 0 : i32
    %1 = tpu.memref_slice %arg1[%0, %c0_i32_1] : memref<1024x32xf32, #tpu.memory_space<any>> -> memref<1x32xf32, #tpu.memory_space<any>>
    %2 = tpu.memref_squeeze %1 : memref<1x32xf32, #tpu.memory_space<any>> -> memref<32xf32, #tpu.memory_space<any>>
    %c0_i32_2 = arith.constant 0 : i32
    %3 = tpu.memref_slice %arg15[%c0_i32, %c0_i32_2] : memref<2x32xf32, #tpu.memory_space<vmem>> -> memref<1x32xf32, #tpu.memory_space<vmem>>
    %4 = tpu.memref_squeeze %3 : memref<1x32xf32, #tpu.memory_space<vmem>> -> memref<32xf32, #tpu.memory_space<vmem>>
    %5 = tpu.memref_slice %arg16[%c0_i32_0] : memref<2x!tpu.dma_semaphore, #tpu.memory_space<semaphore_mem>> -> memref<1x!tpu.dma_semaphore, #tpu.memory_space<semaphore_mem>>
    %6 = tpu.memref_squeeze %5 : memref<1x!tpu.dma_semaphore, #tpu.memory_space<semaphore_mem>> -> memref<!tpu.dma_semaphore, #tpu.memory_space<semaphore_mem>>
    tpu.enqueue_dma source(%2 : memref<32xf32, #tpu.memory_space<any>>) target(%4 : memref<32xf32, #tpu.memory_space<vmem>>) target_semaphore(%6 : memref<!tpu.dma_semaphore, #tpu.memory_space<semaphore_mem>>)
    %c1 = arith.constant 1 : index
    %7 = memref.load %arg0[%c1] : memref<2xi32, #tpu.memory_space<smem>>
    %c1_i32 = arith.constant 1 : i32
    %c1_i32_3 = arith.constant 1 : i32
    %c0_i32_4 = arith.constant 0 : i32
    %8 = tpu.memref_slice %arg1[%7, %c0_i32_4] : memref<1024x32xf32, #tpu.memory_space<any>> -> memref<1x32xf32, #tpu.memory_space<any>>
    %9 = tpu.memref_squeeze %8 : memref<1x32xf32, #tpu.memory_space<any>> -> memref<32xf32, #tpu.memory_space<any>>
    %c0_i32_5 = arith.constant 0 : i32
    %10 = tpu.memref_slice %arg15[%c1_i32, %c0_i32_5] : memref<2x32xf32, #tpu.memory_space<vmem>> -> memref<1x32xf32, #tpu.memory_space<vmem>>
    %11 = tpu.memref_squeeze %10 : memref<1x32xf32, #tpu.memory_space<vmem>> -> memref<32xf32, #tpu.memory_space<vmem>>
    %12 = tpu.memref_slice %arg16[%c1_i32_3] : memref<2x!tpu.dma_semaphore, #tpu.memory_space<semaphore_mem>> -> memref<1x!tpu.dma_semaphore, #tpu.memory_space<semaphore_mem>>
    %13 = tpu.memref_squeeze %12 : memref<1x!tpu.dma_semaphore, #tpu.memory_space<semaphore_mem>> -> memref<!tpu.dma_semaphore, #tpu.memory_space<semaphore_mem>>
    tpu.enqueue_dma source(%9 : memref<32xf32, #tpu.memory_space<any>>) target(%11 : memref<32xf32, #tpu.memory_space<vmem>>) target_semaphore(%13 : memref<!tpu.dma_semaphore, #tpu.memory_space<semaphore_mem>>)
    %c0_6 = arith.constant 0 : index
    %c0_7 = arith.constant 0 : index
    %14 = vector.load %arg2[%c0_6, %c0_7] : memref<2x32xf32, #tpu.memory_space<vmem>>, vector<2x32xf32>
    %c0_8 = arith.constant 0 : index
    %c0_9 = arith.constant 0 : index
    %c0_10 = arith.constant 0 : index
    %15 = vector.load %arg3[%c0_8, %c0_9, %c0_10] : memref<2x8x64xf32, #tpu.memory_space<vmem>>, vector<2x8x64xf32>
    %16 = vector.shape_cast %15 : vector<2x8x64xf32> to vector<16x64xf32>
    %c0_11 = arith.constant 0 : index
    %c0_12 = arith.constant 0 : index
    %17 = vector.load %arg4[%c0_11, %c0_12] : memref<32x32xf32, #tpu.memory_space<vmem>>, vector<32x32xf32>
    %cst = arith.constant dense<0.000000e+00> : vector<2x32xf32>
    %18 = tpu.matmul %14, %17, %cst {dimension_numbers = #tpu.dot_dimension_numbers<[1], [0], [0], [1], [0, 0, 1, 1], [], []>} : vector<2x32xf32>, vector<32x32xf32>, vector<2x32xf32> -> vector<2x32xf32>
    %c0_13 = arith.constant 0 : index
    %c0_14 = arith.constant 0 : index
    %19 = vector.load %arg5[%c0_13, %c0_14] : memref<64x32xf32, #tpu.memory_space<vmem>>, vector<64x32xf32>
    %cst_15 = arith.constant dense<0.000000e+00> : vector<16x32xf32>
    %20 = tpu.matmul %16, %19, %cst_15 {dimension_numbers = #tpu.dot_dimension_numbers<[1], [0], [0], [1], [0, 0, 1, 1], [], []>} : vector<16x64xf32>, vector<64x32xf32>, vector<16x32xf32> -> vector<16x32xf32>
    %21 = vector.shape_cast %20 : vector<16x32xf32> to vector<2x8x32xf32>
    %22 = vector.shape_cast %18 : vector<2x32xf32> to vector<2x1x32xf32>
    %23 = vector.broadcast %22 : vector<2x1x32xf32> to vector<2x8x32xf32>
    %24 = arith.addf %21, %23 : vector<2x8x32xf32>
    %c0_16 = arith.constant 0 : index
    %c0_17 = arith.constant 0 : index
    %25 = vector.load %arg6[%c0_16, %c0_17] : memref<1x32xf32, #tpu.memory_space<vmem>>, vector<1x32xf32>
    %26 = vector.shape_cast %25 : vector<1x32xf32> to vector<1x1x32xf32>
    %27 = vector.broadcast %26 : vector<1x1x32xf32> to vector<2x8x32xf32>
    %28 = arith.addf %24, %27 : vector<2x8x32xf32>
    %29 = math.tanh %28 : vector<2x8x32xf32>
    %c0_18 = arith.constant 0 : index
    %c0_19 = arith.constant 0 : index
    %30 = vector.load %arg7[%c0_18, %c0_19] : memref<1x32xf32, #tpu.memory_space<vmem>>, vector<1x32xf32>
    %31 = vector.shape_cast %30 : vector<1x32xf32> to vector<1x1x32xf32>
    %32 = vector.broadcast %31 : vector<1x1x32xf32> to vector<2x8x32xf32>
    %33 = arith.mulf %29, %32 : vector<2x8x32xf32>
    %cst_20 = arith.constant dense<0.000000e+00> : vector<2x8xf32>
    %34 = vector.multi_reduction <add>, %33, %cst_20 [2] : vector<2x8x32xf32> to vector<2x8xf32>
    %cst_21 = arith.constant dense<0xFF800000> : vector<2xf32>
    %35 = vector.multi_reduction <maximumf>, %34, %cst_21 [1] : vector<2x8xf32> to vector<2xf32>
    %36 = vector.shape_cast %35 : vector<2xf32> to vector<2x1xf32>
    %37 = vector.broadcast %36 : vector<2x1xf32> to vector<2x8xf32>
    %38 = arith.subf %34, %37 : vector<2x8xf32>
    %39 = math.exp %38 : vector<2x8xf32>
    %cst_22 = arith.constant dense<0.000000e+00> : vector<2xf32>
    %40 = vector.multi_reduction <add>, %39, %cst_22 [1] : vector<2x8xf32> to vector<2xf32>
    %41 = vector.shape_cast %40 : vector<2xf32> to vector<2x1xf32>
    %42 = tpu.reciprocal %41 {approx = true} : vector<2x1xf32> -> vector<2x1xf32>
    %43 = vector.broadcast %42 : vector<2x1xf32> to vector<2x8xf32>
    %44 = arith.mulf %39, %43 : vector<2x8xf32>
    %c0_23 = arith.constant 0 : index
    %c0_24 = arith.constant 0 : index
    %45 = vector.load %arg14[%c0_23, %c0_24] : memref<2x8xf32, #tpu.memory_space<vmem>>, vector<2x8xf32>
    tpu.vector_store %arg14[%c0_23, %c0_24], %44 {strides = array<i32>} : memref<2x8xf32, #tpu.memory_space<vmem>>, vector<2x8xf32>,
    %46 = vector.shape_cast %44 : vector<2x8xf32> to vector<2x8x1xf32>
    %47 = vector.broadcast %46 : vector<2x8x1xf32> to vector<2x8x64xf32>
    %48 = arith.mulf %47, %15 : vector<2x8x64xf32>
    %cst_25 = arith.constant dense<0.000000e+00> : vector<2x64xf32>
    %49 = vector.multi_reduction <add>, %48, %cst_25 [1] : vector<2x8x64xf32> to vector<2x64xf32>
    %c0_i32_26 = arith.constant 0 : i32
    %c0_i32_27 = arith.constant 0 : i32
    %c0_i32_28 = arith.constant 0 : i32
    %50 = tpu.memref_slice %arg1[%0, %c0_i32_28] : memref<1024x32xf32, #tpu.memory_space<any>> -> memref<1x32xf32, #tpu.memory_space<any>>
    %51 = tpu.memref_squeeze %50 : memref<1x32xf32, #tpu.memory_space<any>> -> memref<32xf32, #tpu.memory_space<any>>
    %c0_i32_29 = arith.constant 0 : i32
    %52 = tpu.memref_slice %arg15[%c0_i32_26, %c0_i32_29] : memref<2x32xf32, #tpu.memory_space<vmem>> -> memref<1x32xf32, #tpu.memory_space<vmem>>
    %53 = tpu.memref_squeeze %52 : memref<1x32xf32, #tpu.memory_space<vmem>> -> memref<32xf32, #tpu.memory_space<vmem>>
    %54 = tpu.memref_slice %arg16[%c0_i32_27] : memref<2x!tpu.dma_semaphore, #tpu.memory_space<semaphore_mem>> -> memref<1x!tpu.dma_semaphore, #tpu.memory_space<semaphore_mem>>
    %55 = tpu.memref_squeeze %54 : memref<1x!tpu.dma_semaphore, #tpu.memory_space<semaphore_mem>> -> memref<!tpu.dma_semaphore, #tpu.memory_space<semaphore_mem>>
    tpu.wait_dma2 semaphore(%55 : memref<!tpu.dma_semaphore, #tpu.memory_space<semaphore_mem>>) src(%51 : memref<32xf32, #tpu.memory_space<any>>) dst(%53 : memref<32xf32, #tpu.memory_space<vmem>>)
    %c1_i32_30 = arith.constant 1 : i32
    %c1_i32_31 = arith.constant 1 : i32
    %c0_i32_32 = arith.constant 0 : i32
    %56 = tpu.memref_slice %arg1[%7, %c0_i32_32] : memref<1024x32xf32, #tpu.memory_space<any>> -> memref<1x32xf32, #tpu.memory_space<any>>
    %57 = tpu.memref_squeeze %56 : memref<1x32xf32, #tpu.memory_space<any>> -> memref<32xf32, #tpu.memory_space<any>>
    %c0_i32_33 = arith.constant 0 : i32
    %58 = tpu.memref_slice %arg15[%c1_i32_30, %c0_i32_33] : memref<2x32xf32, #tpu.memory_space<vmem>> -> memref<1x32xf32, #tpu.memory_space<vmem>>
    %59 = tpu.memref_squeeze %58 : memref<1x32xf32, #tpu.memory_space<vmem>> -> memref<32xf32, #tpu.memory_space<vmem>>
    %60 = tpu.memref_slice %arg16[%c1_i32_31] : memref<2x!tpu.dma_semaphore, #tpu.memory_space<semaphore_mem>> -> memref<1x!tpu.dma_semaphore, #tpu.memory_space<semaphore_mem>>
    %61 = tpu.memref_squeeze %60 : memref<1x!tpu.dma_semaphore, #tpu.memory_space<semaphore_mem>> -> memref<!tpu.dma_semaphore, #tpu.memory_space<semaphore_mem>>
    tpu.wait_dma2 semaphore(%61 : memref<!tpu.dma_semaphore, #tpu.memory_space<semaphore_mem>>) src(%57 : memref<32xf32, #tpu.memory_space<any>>) dst(%59 : memref<32xf32, #tpu.memory_space<vmem>>)
    %c0_34 = arith.constant 0 : index
    %c0_35 = arith.constant 0 : index
    %62 = vector.load %arg15[%c0_34, %c0_35] : memref<2x32xf32, #tpu.memory_space<vmem>>, vector<2x32xf32>
    %63 = tpu.concatenate %62, %49 in 1 : vector<2x32xf32>, vector<2x64xf32> -> vector<2x96xf32>
    %c0_36 = arith.constant 0 : index
    %c0_37 = arith.constant 0 : index
    %64 = vector.load %arg8[%c0_36, %c0_37] : memref<96x96xf32, #tpu.memory_space<vmem>>, vector<96x96xf32>
    %cst_38 = arith.constant dense<0.000000e+00> : vector<2x96xf32>
    %65 = tpu.matmul %63, %64, %cst_38 {dimension_numbers = #tpu.dot_dimension_numbers<[1], [0], [0], [1], [0, 0, 1, 1], [], []>} : vector<2x96xf32>, vector<96x96xf32>, vector<2x96xf32> -> vector<2x96xf32>
    %c0_39 = arith.constant 0 : index
    %c0_40 = arith.constant 0 : index
    %66 = vector.load %arg10[%c0_39, %c0_40] : memref<1x96xf32, #tpu.memory_space<vmem>>, vector<1x96xf32>
    %67 = vector.broadcast %66 : vector<1x96xf32> to vector<2x96xf32>
    %68 = arith.addf %65, %67 : vector<2x96xf32>
    %c0_41 = arith.constant 0 : index
    %c0_42 = arith.constant 0 : index
    %69 = vector.load %arg9[%c0_41, %c0_42] : memref<32x96xf32, #tpu.memory_space<vmem>>, vector<32x96xf32>
    %cst_43 = arith.constant dense<0.000000e+00> : vector<2x96xf32>
    %70 = tpu.matmul %14, %69, %cst_43 {dimension_numbers = #tpu.dot_dimension_numbers<[1], [0], [0], [1], [0, 0, 1, 1], [], []>} : vector<2x32xf32>, vector<32x96xf32>, vector<2x96xf32> -> vector<2x96xf32>
    %c0_44 = arith.constant 0 : index
    %c0_45 = arith.constant 0 : index
    %71 = vector.load %arg11[%c0_44, %c0_45] : memref<1x96xf32, #tpu.memory_space<vmem>>, vector<1x96xf32>
    %72 = vector.broadcast %71 : vector<1x96xf32> to vector<2x96xf32>
    %73 = arith.addf %70, %72 : vector<2x96xf32>
    %74 = vector.extract_strided_slice %68 {offsets = [0, 0], sizes = [2, 32], strides = [1, 1]} : vector<2x96xf32> to vector<2x32xf32>
    %75 = vector.extract_strided_slice %73 {offsets = [0, 0], sizes = [2, 32], strides = [1, 1]} : vector<2x96xf32> to vector<2x32xf32>
    %76 = arith.addf %74, %75 : vector<2x32xf32>
    %77 = arith.negf %76 : vector<2x32xf32>
    %78 = math.exp %77 : vector<2x32xf32>
    %cst_46 = arith.constant 1.000000e+00 : f32
    %79 = vector.broadcast %cst_46 : f32 to vector<2x32xf32>
    %80 = arith.addf %79, %78 : vector<2x32xf32>
    %81 = arith.divf %79, %80 : vector<2x32xf32>
    %82 = vector.extract_strided_slice %68 {offsets = [0, 32], sizes = [2, 32], strides = [1, 1]} : vector<2x96xf32> to vector<2x32xf32>
    %83 = vector.extract_strided_slice %73 {offsets = [0, 32], sizes = [2, 32], strides = [1, 1]} : vector<2x96xf32> to vector<2x32xf32>
    %84 = arith.addf %82, %83 : vector<2x32xf32>
    %85 = arith.negf %84 : vector<2x32xf32>
    %86 = math.exp %85 : vector<2x32xf32>
    %cst_47 = arith.constant 1.000000e+00 : f32
    %87 = vector.broadcast %cst_47 : f32 to vector<2x32xf32>
    %88 = arith.addf %87, %86 : vector<2x32xf32>
    %89 = arith.divf %87, %88 : vector<2x32xf32>
    %90 = vector.extract_strided_slice %68 {offsets = [0, 64], sizes = [2, 32], strides = [1, 1]} : vector<2x96xf32> to vector<2x32xf32>
    %91 = vector.extract_strided_slice %73 {offsets = [0, 64], sizes = [2, 32], strides = [1, 1]} : vector<2x96xf32> to vector<2x32xf32>
    %92 = arith.mulf %81, %91 : vector<2x32xf32>
    %93 = arith.addf %90, %92 : vector<2x32xf32>
    %94 = math.tanh %93 : vector<2x32xf32>
    %cst_48 = arith.constant 1.000000e+00 : f32
    %95 = vector.broadcast %cst_48 : f32 to vector<2x32xf32>
    %96 = arith.subf %95, %89 : vector<2x32xf32>
    %97 = arith.mulf %96, %94 : vector<2x32xf32>
    %98 = arith.mulf %89, %14 : vector<2x32xf32>
    %99 = arith.addf %97, %98 : vector<2x32xf32>
    %c0_49 = arith.constant 0 : index
    %c0_50 = arith.constant 0 : index
    %100 = vector.load %arg13[%c0_49, %c0_50] : memref<2x32xf32, #tpu.memory_space<vmem>>, vector<2x32xf32>
    tpu.vector_store %arg13[%c0_49, %c0_50], %99 {strides = array<i32>} : memref<2x32xf32, #tpu.memory_space<vmem>>, vector<2x32xf32>,
    %101 = tpu.concatenate %99, %49, %62 in 1 : vector<2x32xf32>, vector<2x64xf32>, vector<2x32xf32> -> vector<2x128xf32>
    %102 = arith.truncf %101 : vector<2x128xf32> to vector<2x128xbf16>
    %c0_51 = arith.constant 0 : index
    %c0_52 = arith.constant 0 : index
    %103 = vector.load %arg12[%c0_51, %c0_52] : memref<2x128xbf16, #tpu.memory_space<vmem>>, vector<2x128xbf16>
    tpu.vector_store %arg12[%c0_51, %c0_52], %102 {strides = array<i32>} : memref<2x128xbf16, #tpu.memory_space<vmem>>, vector<2x128xbf16>,
    return
  }
}

module attributes {stable_mosaic.version = 11 : i64} {
  func.func @fc_kernel(%arg0: i32, %arg1: memref<2x128xbf16, #tpu.memory_space<vmem>>, %arg2: memref<128x512xbf16, #tpu.memory_space<vmem>>, %arg3: memref<1x512xf32, #tpu.memory_space<vmem>>, %arg4: memref<2x512xf32, #tpu.memory_space<vmem>>) attributes {dimension_semantics = [#tpu.dimension_semantics<parallel>], iteration_bounds = array<i64: 2>, scalar_prefetch = 0 : i64, scratch_operands = 0 : i64, tpu.core_type = #tpu.core_type<tc>, window_params = [{pipeline_mode = #tpu.pipeline_mode<synchronous>, transform_indices = @transform_0, window_bounds = array<i64: 2, 128>}, {transform_indices = @transform_1, window_bounds = array<i64: 128, 512>}, {transform_indices = @transform_2, window_bounds = array<i64: 1, 512>}, {transform_indices = @transform_3, window_bounds = array<i64: 2, 512>}]} {
    %c0 = arith.constant 0 : index
    %c0_0 = arith.constant 0 : index
    %0 = vector.load %arg1[%c0, %c0_0] : memref<2x128xbf16, #tpu.memory_space<vmem>>, vector<2x128xbf16>
    %c0_1 = arith.constant 0 : index
    %c0_2 = arith.constant 0 : index
    %1 = vector.load %arg2[%c0_1, %c0_2] : memref<128x512xbf16, #tpu.memory_space<vmem>>, vector<128x512xbf16>
    %cst = arith.constant dense<0.000000e+00> : vector<2x512xf32>
    %2 = tpu.matmul %0, %1, %cst {dimension_numbers = #tpu.dot_dimension_numbers<[1], [0], [0], [1], [0, 0, 1, 1], [], []>} : vector<2x128xbf16>, vector<128x512xbf16>, vector<2x512xf32> -> vector<2x512xf32>
    %c0_3 = arith.constant 0 : index
    %c0_4 = arith.constant 0 : index
    %3 = vector.load %arg3[%c0_3, %c0_4] : memref<1x512xf32, #tpu.memory_space<vmem>>, vector<1x512xf32>
    %4 = vector.broadcast %3 : vector<1x512xf32> to vector<2x512xf32>
    %5 = arith.addf %2, %4 : vector<2x512xf32>
    %c0_5 = arith.constant 0 : index
    %c0_6 = arith.constant 0 : index
    %6 = vector.load %arg4[%c0_5, %c0_6] : memref<2x512xf32, #tpu.memory_space<vmem>>, vector<2x512xf32>
    tpu.vector_store %arg4[%c0_5, %c0_6], %5 {strides = array<i32>} : memref<2x512xf32, #tpu.memory_space<vmem>>, vector<2x512xf32>,
    return
  }
  func.func @transform_0(%arg0: i32) -> (i32, i32) {
    %c0_i32 = arith.constant 0 : i32
    %c0_i32_0 = arith.constant 0 : i32
    %c0_i32_1 = arith.constant 0 : i32
    return %c0_i32, %c0_i32_0 : i32, i32
  }
  func.func @transform_1(%arg0: i32) -> (i32, i32) {
    %c0_i32 = arith.constant 0 : i32
    %c0_i32_0 = arith.constant 0 : i32
    return %c0_i32, %arg0 : i32, i32
  }
  func.func @transform_2(%arg0: i32) -> (i32, i32) {
    %c0_i32 = arith.constant 0 : i32
    %c0_i32_0 = arith.constant 0 : i32
    return %c0_i32, %arg0 : i32, i32
  }
  func.func @transform_3(%arg0: i32) -> (i32, i32) {
    %c0_i32 = arith.constant 0 : i32
    %c0_i32_0 = arith.constant 0 : i32
    return %c0_i32, %arg0 : i32, i32
  }
}

</mosaic_0001>

<llo_original>
// kernel: decoder_forward.3
$region0: #{decoder_forward.3}
  #allocation0 [shape = 'u32[]', space=smem, size = 0x4, offset = 0x4, fixed_abs, tag = 'smem constant byte address 0x4 - core index']
  #allocation1 [shape = 'u32[144,128]{1,0:T(1,128)}', space=vmem, size = 0x12000, scoped, tag = 'internal scratch']
  %s0 = inlined_call_operand.vmem [shape: bf16[2,128], index: 0, kind: input, shape index: {}]
  %s1 = inlined_call_operand.vmem [shape: bf16[128,1024], index: 1, kind: input, shape index: {}]
  %s2 = inlined_call_operand.vmem [shape: f32[1,1024], index: 2, kind: input, shape index: {}]
  %s3 = inlined_call_operand.hbm [shape: f32[2,1024], index: 3, kind: output, shape index: {}]
  %s4 = sld [smem:[#allocation0]]
  $region68: #{decoder_forward.3} parent=0
    _
  %s6 = ssub.s32 1, %s4
  %s7 = scalar_select 0, %s6, %s4
  $region1: #{decoder_forward.3} parent=0
    #allocation2 [shape = 'u8[262144]{0}', space=vmem, size = 0x40000, scoped, tag = 'input window, operand 1']
    #allocation3 [shape = 'u8[8192]{0}', space=vmem, size = 0x2000, scoped, tag = 'output window, operand 0']
    #allocation4 [shape = 's32[2]{0}', space=sflag, size = 0x8, scoped, tag = 'scoped memory for decoder_forward.3']
    %8 = vsyncpa [#allocation4], 0
    %s9 = scalar_lea.sflag [#allocation4], 1
    %10 = vsyncpa %s9, 0
    loop: start=0, step=1, limit=4
    $region2: #{decoder_forward.3} parent=1 // loop_pre_header
      _
    $region3: #{decoder_forward.3} parent=1 // loop_header
      %s12 = sphi 0, %s16
      %p13 = scmp.ge.s32.totalorder %s12, 4
      %s20 = sphi 0, %s20
      %s22 = sphi 0, %s20
      %s23 = sphi 0, %s22
      %s37 = sphi 0, %s23
      %s43 = sphi 0, %s45
      %s46 = sphi 0, %s43
      %s47 = sphi 0, %s46
      %s63 = sphi 0, %s47
      %s69 = sphi 0, %s71
      %s72 = sphi 0, %s69
      %s73 = sphi 0, %s72
      %s89 = sphi 0, %s73
      %s95 = sphi 0, %s97
      %s98 = sphi 0, %s95
      %s99 = sphi 0, %s98
      %s115 = sphi 0, %s99
    $region4: #{decoder_forward.3} parent=1 // loop_header_branch
      %15 = sbr.rel (%p13) target = $region8
    $region5: #{decoder_forward.3} parent=1 // loop_body
      %s17 = ssub.s32 %s12, 1
      %s18 = ssub.s32 %s12, 2
      %s19 = sadd.s32 %s12, 1
      %s21 = sadd.s32 %s20, 1
      %p24 = scmp.eq.s32.totalorder %s12, 1
      %p25 = scmp.ne.s32.totalorder %s20, %s22
      %p26 = scmp.eq.s32.totalorder %s12, 0
      %p27 = por %p25, %p26
      %p28 = scmp.ne.s32.totalorder %s20, %s22
      %p29 = scmp.eq.s32.totalorder %s17, 1
      %p30 = por %p28, %p29
      %p31 = scmp.ne.s32.totalorder %s22, %s23
      %p32 = scmp.eq.s32.totalorder %s17, 0
      %p33 = por %p31, %p32
      %p34 = scmp.ne.s32.totalorder %s22, %s23
      %p35 = scmp.eq.s32.totalorder %s18, 1
      %p36 = por %p34, %p35
      %p38 = scmp.ne.s32.totalorder %s23, %s37
      %p39 = scmp.eq.s32.totalorder %s18, 0
      %p40 = por %p38, %p39
      %s41 = ssub.s32 %s12, %s19
      %p42 = scmp.eq.s32.totalorder %s41, 0
      %s44 = sadd.s32 %s43, 1
      %s45 = scalar_select %p42, %s43, %s44
      %p48 = pneg %p42
      %p49 = scmp.eq.s32.totalorder %s12, 1
      %p50 = por %p48, %p49
      %p51 = scmp.ne.s32.totalorder %s43, %s46
      %p52 = scmp.eq.s32.totalorder %s12, 0
      %p53 = por %p51, %p52
      %p54 = scmp.ne.s32.totalorder %s43, %s46
      %p55 = scmp.eq.s32.totalorder %s17, 1
      %p56 = por %p54, %p55
      %p57 = scmp.ne.s32.totalorder %s46, %s47
      %p58 = scmp.eq.s32.totalorder %s17, 0
      %p59 = por %p57, %p58
      %p60 = scmp.ne.s32.totalorder %s46, %s47
      %p61 = scmp.eq.s32.totalorder %s18, 1
      %p62 = por %p60, %p61
      %p64 = scmp.ne.s32.totalorder %s47, %s63
      %p65 = scmp.eq.s32.totalorder %s18, 0
      %p66 = por %p64, %p65
      %s67 = ssub.s32 %s12, %s19
      %p68 = scmp.eq.s32.totalorder %s67, 0
      %s70 = sadd.s32 %s69, 1
      %s71 = scalar_select %p68, %s69, %s70
      %p74 = pneg %p68
      %p75 = scmp.eq.s32.totalorder %s12, 1
      %p76 = por %p74, %p75
      %p77 = scmp.ne.s32.totalorder %s69, %s72
      %p78 = scmp.eq.s32.totalorder %s12, 0
      %p79 = por %p77, %p78
      %p80 = scmp.ne.s32.totalorder %s69, %s72
      %p81 = scmp.eq.s32.totalorder %s17, 1
      %p82 = por %p80, %p81
      %p83 = scmp.ne.s32.totalorder %s72, %s73
      %p84 = scmp.eq.s32.totalorder %s17, 0
      %p85 = por %p83, %p84
      %p86 = scmp.ne.s32.totalorder %s72, %s73
      %p87 = scmp.eq.s32.totalorder %s18, 1
      %p88 = por %p86, %p87
      %p90 = scmp.ne.s32.totalorder %s73, %s89
      %p91 = scmp.eq.s32.totalorder %s18, 0
      %p92 = por %p90, %p91
      %s93 = ssub.s32 %s12, %s19
      %p94 = scmp.eq.s32.totalorder %s93, 0
      %s96 = sadd.s32 %s95, 1
      %s97 = scalar_select %p94, %s95, %s96
      %p100 = pneg %p94
      %p101 = scmp.eq.s32.totalorder %s12, 1
      %p102 = por %p100, %p101
      %p103 = scmp.ne.s32.totalorder %s95, %s98
      %p104 = scmp.eq.s32.totalorder %s12, 0
      %p105 = por %p103, %p104
      %p106 = scmp.ne.s32.totalorder %s95, %s98
      %p107 = scmp.eq.s32.totalorder %s17, 1
      %p108 = por %p106, %p107
      %p109 = scmp.ne.s32.totalorder %s98, %s99
      %p110 = scmp.eq.s32.totalorder %s17, 0
      %p111 = por %p109, %p110
      %p112 = scmp.ne.s32.totalorder %s98, %s99
      %p113 = scmp.eq.s32.totalorder %s18, 1
      %p114 = por %p112, %p113
      %p116 = scmp.ne.s32.totalorder %s99, %s115
      %p117 = scmp.eq.s32.totalorder %s18, 0
      %p118 = por %p116, %p117
      %p119 = scmp.le.s32.totalorder 1, %s12
      %p120 = scmp.lt.s32.totalorder %s12, 3
      %p121 = pnand %p119, %p120
      %p122 = pneg %p121
      // Predicated region
      $region9: #{decoder_forward.3} parent=5 // pred_check
        _
      $region10: #{decoder_forward.3} parent=5 // pred_check_branch
        %124 = sbr.rel (%p121) target = $region12
      $region11: #{decoder_forward.3} parent=5 // pred_region
        %s125 = ssub.s32 %s12, 1
        // Predicated region
        $region13: #{decoder_forward.3} parent=11 // pred_check
          %p126 = pneg %p33
        $region14: #{decoder_forward.3} parent=11 // pred_check_branch
          %128 = sbr.rel (%p126) target = $region16
        $region15: #{decoder_forward.3} parent=11 // pred_region
          _
        $region16: #{decoder_forward.3} parent=11 // pred_fallthru
          _
      $region12: #{decoder_forward.3} parent=5 // pred_fallthru
        _
      %p129 = scmp.lt.s32.totalorder %s12, 2
      // Predicated region
      $region17: #{decoder_forward.3} parent=5 // pred_check
        %p130 = pneg %p129
      $region18: #{decoder_forward.3} parent=5 // pred_check_branch
        %132 = sbr.rel (%p130) target = $region20
      $region19: #{decoder_forward.3} parent=5 // pred_region
        // Predicated region
        $region21: #{decoder_forward.3} parent=19 // pred_check
          %p133 = pneg %p53
        $region22: #{decoder_forward.3} parent=19 // pred_check_branch
          %135 = sbr.rel (%p133) target = $region24
        $region23: #{decoder_forward.3} parent=19 // pred_region
          %s136 = sand.u32 %s43, 1
          %s137 = sand.u32 %s43, 1
          %s138 = smul.addr %s137, 256
          %s139 = scalar_lea.vmem [#allocation2], %s138
          %s140 = smul.u32 4, %s12
          %s141 = smul.addr %s140, 4
          %s142 = scalar_lea.vmem %s1, %s141
          // Predicated region
          $region25: #{decoder_forward.3} parent=23 // pred_check
            _
          $region26: #{decoder_forward.3} parent=23 // pred_check_branch
            %144 = sbr.rel (0) target = $region28
          $region27: #{decoder_forward.3} parent=23 // pred_region
            // Predicated region
            $region29: #{decoder_forward.3} parent=27 // pred_check
              _
            $region30: #{decoder_forward.3} parent=27 // pred_check_branch
              %146 = sbr.rel (0) target = $region32
            $region31: #{decoder_forward.3} parent=27 // pred_region
              loop: start=0, step=1, limit=1
              $region33: #{decoder_forward.3} parent=31 // loop_pre_header
                _
              $region34: #{decoder_forward.3} parent=31 // loop_header
                %s148 = sphi 0, %s152
                %p149 = scmp.ge.s32.totalorder %s148, 1
                %s153 = sphi %s142, %s142
                %s154 = sphi %s139, %s139
              $region35: #{decoder_forward.3} parent=31 // loop_header_branch
                %151 = sbr.rel (%p149) target = $region39
              $region36: #{decoder_forward.3} parent=31 // loop_body
                %v155 = vld [vmem:[%s153] sm:$0xff]
                %156 = vst [vmem:[%s154] sm:$0xff] %v155
                %v157 = vld [vmem:[%s153 + $0x8] sm:$0xff]
                %158 = vst [vmem:[%s154 + $0x8] sm:$0xff] %v157
                %v159 = vld [vmem:[%s153 + $0x20] sm:$0xff]
                %160 = vst [vmem:[%s154 + $0x10] sm:$0xff] %v159
                %v161 = vld [vmem:[%s153 + $0x28] sm:$0xff]
                %162 = vst [vmem:[%s154 + $0x18] sm:$0xff] %v161
                %v163 = vld [vmem:[%s153 + $0x40] sm:$0xff]
                %164 = vst [vmem:[%s154 + $0x20] sm:$0xff] %v163
                %v165 = vld [vmem:[%s153 + $0x48] sm:$0xff]
                %166 = vst [vmem:[%s154 + $0x28] sm:$0xff] %v165
                %v167 = vld [vmem:[%s153 + $0x60] sm:$0xff]
                %168 = vst [vmem:[%s154 + $0x30] sm:$0xff] %v167
                %v169 = vld [vmem:[%s153 + $0x68] sm:$0xff]
                %170 = vst [vmem:[%s154 + $0x38] sm:$0xff] %v169
                %v171 = vld [vmem:[%s153 + $0x80] sm:$0xff]
                %172 = vst [vmem:[%s154 + $0x40] sm:$0xff] %v171
                %v173 = vld [vmem:[%s153 + $0x88] sm:$0xff]
                %174 = vst [vmem:[%s154 + $0x48] sm:$0xff] %v173
                %v175 = vld [vmem:[%s153 + $0xa0] sm:$0xff]
                %176 = vst [vmem:[%s154 + $0x50] sm:$0xff] %v175
                %v177 = vld [vmem:[%s153 + $0xa8] sm:$0xff]
                %178 = vst [vmem:[%s154 + $0x58] sm:$0xff] %v177
                %v179 = vld [vmem:[%s153 + $0xc0] sm:$0xff]
                %180 = vst [vmem:[%s154 + $0x60] sm:$0xff] %v179
                %v181 = vld [vmem:[%s153 + $0xc8] sm:$0xff]
                %182 = vst [vmem:[%s154 + $0x68] sm:$0xff] %v181
                %v183 = vld [vmem:[%s153 + $0xe0] sm:$0xff]
                %184 = vst [vmem:[%s154 + $0x70] sm:$0xff] %v183
                %v185 = vld [vmem:[%s153 + $0xe8] sm:$0xff]
                %186 = vst [vmem:[%s154 + $0x78] sm:$0xff] %v185
                %v187 = vld [vmem:[%s153 + $0x100] sm:$0xff]
                %188 = vst [vmem:[%s154 + $0x80] sm:$0xff] %v187
                %v189 = vld [vmem:[%s153 + $0x108] sm:$0xff]
                %190 = vst [vmem:[%s154 + $0x88] sm:$0xff] %v189
                %v191 = vld [vmem:[%s153 + $0x120] sm:$0xff]
                %192 = vst [vmem:[%s154 + $0x90] sm:$0xff] %v191
                %v193 = vld [vmem:[%s153 + $0x128] sm:$0xff]
                %194 = vst [vmem:[%s154 + $0x98] sm:$0xff] %v193
                %v195 = vld [vmem:[%s153 + $0x140] sm:$0xff]
                %196 = vst [vmem:[%s154 + $0xa0] sm:$0xff] %v195
                %v197 = vld [vmem:[%s153 + $0x148] sm:$0xff]
                %198 = vst [vmem:[%s154 + $0xa8] sm:$0xff] %v197
                %v199 = vld [vmem:[%s153 + $0x160] sm:$0xff]
                %200 = vst [vmem:[%s154 + $0xb0] sm:$0xff] %v199
                %v201 = vld [vmem:[%s153 + $0x168] sm:$0xff]
                %202 = vst [vmem:[%s154 + $0xb8] sm:$0xff] %v201
                %v203 = vld [vmem:[%s153 + $0x180] sm:$0xff]
                %204 = vst [vmem:[%s154 + $0xc0] sm:$0xff] %v203
                %v205 = vld [vmem:[%s153 + $0x188] sm:$0xff]
                %206 = vst [vmem:[%s154 + $0xc8] sm:$0xff] %v205
                %v207 = vld [vmem:[%s153 + $0x1a0] sm:$0xff]
                %208 = vst [vmem:[%s154 + $0xd0] sm:$0xff] %v207
                %v209 = vld [vmem:[%s153 + $0x1a8] sm:$0xff]
                %210 = vst [vmem:[%s154 + $0xd8] sm:$0xff] %v209
                %v211 = vld [vmem:[%s153 + $0x1c0] sm:$0xff]
                %212 = vst [vmem:[%s154 + $0xe0] sm:$0xff] %v211
                %v213 = vld [vmem:[%s153 + $0x1c8] sm:$0xff]
                %214 = vst [vmem:[%s154 + $0xe8] sm:$0xff] %v213
                %v215 = vld [vmem:[%s153 + $0x1e0] sm:$0xff]
                %216 = vst [vmem:[%s154 + $0xf0] sm:$0xff] %v215
                %v217 = vld [vmem:[%s153 + $0x1e8] sm:$0xff]
                %218 = vst [vmem:[%s154 + $0xf8] sm:$0xff] %v217
              $region37: #{decoder_forward.3} parent=31 // loop_footer
                %s152 = sadd.s32 1, %s148
              $region38: #{decoder_forward.3} parent=31 // loop_footer_branch
                %147 = sbr.rel target = $region34
              $region39: #{decoder_forward.3} parent=31 // loop_exit
                _
            $region32: #{decoder_forward.3} parent=27 // pred_fallthru
              _
            // Predicated region
            $region40: #{decoder_forward.3} parent=27 // pred_check
              _
            $region41: #{decoder_forward.3} parent=27 // pred_check_branch
              %220 = sbr.rel target = $region43
            $region42: #{decoder_forward.3} parent=27 // pred_region
              _
            $region43: #{decoder_forward.3} parent=27 // pred_fallthru
              _
          $region28: #{decoder_forward.3} parent=23 // pred_fallthru
            _
          %221 = vnop
        $region24: #{decoder_forward.3} parent=19 // pred_fallthru
          _
        // Predicated region
        $region44: #{decoder_forward.3} parent=19 // pred_check
          %p222 = pneg %p79
        $region45: #{decoder_forward.3} parent=19 // pred_check_branch
          %224 = sbr.rel (%p222) target = $region47
        $region46: #{decoder_forward.3} parent=19 // pred_region
          %s225 = smul.u32 4, %s12
          %p226 = scmp.lt.s32.totalorder %s225, 7
          %s227 = scalar_select %p226, %s225, 7
          %s228 = scalar_lea.vmem %s2, %s227
          %s229 = smul.u32 4, %s12
        $region47: #{decoder_forward.3} parent=19 // pred_fallthru
          _
      $region20: #{decoder_forward.3} parent=5 // pred_fallthru
        _
      %p230 = scmp.le.s32.totalorder 1, %s12
      %p231 = scmp.lt.s32.totalorder %s12, 3
      %p232 = pnand %p230, %p231
      %p233 = pneg %p232
      // Predicated region
      $region48: #{decoder_forward.3} parent=5 // pred_check
        _
      $region49: #{decoder_forward.3} parent=5 // pred_check_branch
        %235 = sbr.rel (%p232) target = $region51
      $region50: #{decoder_forward.3} parent=5 // pred_region
        %s236 = ssub.s32 %s12, 1
        %s237 = sand.u32 %s46, 1
        %s238 = sand.u32 %s46, 1
        %s239 = smul.addr %s238, 256
        %s240 = scalar_lea.vmem [#allocation2], %s239
        // Predicated region
        $region52: #{decoder_forward.3} parent=50 // pred_check
          %p241 = pneg %p59
        $region53: #{decoder_forward.3} parent=50 // pred_check_branch
          %243 = sbr.rel (%p241) target = $region55
        $region54: #{decoder_forward.3} parent=50 // pred_region
          _
        $region55: #{decoder_forward.3} parent=50 // pred_fallthru
          _
        %p244 = pneg %p33
        %p245 = pneg %p30
        %s246 = sand.u32 %s46, 1
        %s247 = sand.u32 %s46, 1
        %s248 = smul.addr %s247, 256
        %s249 = scalar_lea.vmem [#allocation2], %s248
        %p250 = pneg %p59
        %p251 = pneg %p56
        %s252 = smul.u32 4, %s17
        %p253 = scmp.lt.s32.totalorder %s252, 7
        %s254 = scalar_select %p253, %s252, 7
        %s255 = scalar_lea.vmem %s2, %s254
        %p256 = pneg %p85
        %p257 = pneg %p82
        %p258 = pneg %p111
        %p259 = pneg %p108
        %s260 = sand.u32 %s98, 1
        %s261 = scalar_lea.sflag [#allocation4], %s260
        %s262 = sand.u32 %s98, 1
        %s263 = smul.addr %s262, 8
        %s264 = scalar_lea.vmem [#allocation3], %s263
        %s265 = smul.u32 4, %s17
        %s266 = smul.u32 4, %s17
        %p267 = scmp.lt.s32.totalorder %s266, 7
        %s268 = scalar_select %p267, %s266, 7
        %s269 = scalar_lea.vmem %s2, %s268
        %s270 = smul.u32 4, %s17
        %s271 = smul.u32 4, %s17
        %v273 = vld [vmem:[%s0] sm:$0x1]
        %v274 = vld [vmem:[%s240] sm:$0xff]
        %v275 = vld [vmem:[%s240 + $0x8] sm:$0xff]
        %v276 = vld [vmem:[%s240 + $0x10] sm:$0xff]
        %v277 = vld [vmem:[%s240 + $0x18] sm:$0xff]
        %v278 = vld [vmem:[%s240 + $0x20] sm:$0xff]
        %v279 = vld [vmem:[%s240 + $0x28] sm:$0xff]
        %v280 = vld [vmem:[%s240 + $0x30] sm:$0xff]
        %v281 = vld [vmem:[%s240 + $0x38] sm:$0xff]
        %v282 = vld [vmem:[%s240 + $0x40] sm:$0xff]
        %v283 = vld [vmem:[%s240 + $0x48] sm:$0xff]
        %v284 = vld [vmem:[%s240 + $0x50] sm:$0xff]
        %v285 = vld [vmem:[%s240 + $0x58] sm:$0xff]
        %v286 = vld [vmem:[%s240 + $0x60] sm:$0xff]
        %v287 = vld [vmem:[%s240 + $0x68] sm:$0xff]
        %v288 = vld [vmem:[%s240 + $0x70] sm:$0xff]
        %v289 = vld [vmem:[%s240 + $0x78] sm:$0xff]
        %v290 = vld [vmem:[%s240 + $0x80] sm:$0xff]
        %v291 = vld [vmem:[%s240 + $0x88] sm:$0xff]
        %v292 = vld [vmem:[%s240 + $0x90] sm:$0xff]
        %v293 = vld [vmem:[%s240 + $0x98] sm:$0xff]
        %v294 = vld [vmem:[%s240 + $0xa0] sm:$0xff]
        %v295 = vld [vmem:[%s240 + $0xa8] sm:$0xff]
        %v296 = vld [vmem:[%s240 + $0xb0] sm:$0xff]
        %v297 = vld [vmem:[%s240 + $0xb8] sm:$0xff]
        %v298 = vld [vmem:[%s240 + $0xc0] sm:$0xff]
        %v299 = vld [vmem:[%s240 + $0xc8] sm:$0xff]
        %v300 = vld [vmem:[%s240 + $0xd0] sm:$0xff]
        %v301 = vld [vmem:[%s240 + $0xd8] sm:$0xff]
        %v302 = vld [vmem:[%s240 + $0xe0] sm:$0xff]
        %v303 = vld [vmem:[%s240 + $0xe8] sm:$0xff]
        %v304 = vld [vmem:[%s240 + $0xf0] sm:$0xff]
        %v305 = vld [vmem:[%s240 + $0xf8] sm:$0xff]
        %v306 = vld [vmem:[%s269] sm:$0xf]
        %v308 = vlaneseq
        %v309 = vshrl.u32 %v308, 7
        %v310 = vsub.s32 0, %v309
        %v311 = vrot.slane %v306, %v310
        %v312 = vlaneseq
        %v313 = vshrl.u32 %v312, 7
        %v314 = vsub.s32 1, %v313
        %v315 = vrot.slane %v306, %v314
        %v316 = vlaneseq
        %v317 = vshrl.u32 %v316, 7
        %v318 = vsub.s32 2, %v317
        %v319 = vrot.slane %v306, %v318
        %v320 = vlaneseq
        %v321 = vshrl.u32 %v320, 7
        %v322 = vsub.s32 3, %v321
        %v323 = vrot.slane %v306, %v322
        %v360 = vunpack.c.l.b16 %v274
        %v361 = vunpack.c.h.b16 %v274
        %v362 = vunpack.c.l.b16 %v275
        %v363 = vunpack.c.h.b16 %v275
        %v364 = vunpack.c.l.b16 %v276
        %v365 = vunpack.c.h.b16 %v276
        %v366 = vunpack.c.l.b16 %v277
        %v367 = vunpack.c.h.b16 %v277
        %v368 = vunpack.c.l.b16 %v278
        %v369 = vunpack.c.h.b16 %v278
        %v370 = vunpack.c.l.b16 %v279
        %v371 = vunpack.c.h.b16 %v279
        %v372 = vunpack.c.l.b16 %v280
        %v373 = vunpack.c.h.b16 %v280
        %v374 = vunpack.c.l.b16 %v281
        %v375 = vunpack.c.h.b16 %v281
        %v376 = vunpack.c.l.b16 %v282
        %v377 = vunpack.c.h.b16 %v282
        %v378 = vunpack.c.l.b16 %v283
        %v379 = vunpack.c.h.b16 %v283
        %v380 = vunpack.c.l.b16 %v284
        %v381 = vunpack.c.h.b16 %v284
        %v382 = vunpack.c.l.b16 %v285
        %v383 = vunpack.c.h.b16 %v285
        %v384 = vunpack.c.l.b16 %v286
        %v385 = vunpack.c.h.b16 %v286
        %v386 = vunpack.c.l.b16 %v287
        %v387 = vunpack.c.h.b16 %v287
        %v388 = vunpack.c.l.b16 %v288
        %v389 = vunpack.c.h.b16 %v288
        %v390 = vunpack.c.l.b16 %v289
        %v391 = vunpack.c.h.b16 %v289
        %v392 = vunpack.c.l.b16 %v290
        %v393 = vunpack.c.h.b16 %v290
        %v394 = vunpack.c.l.b16 %v291
        %v395 = vunpack.c.h.b16 %v291
        %v396 = vunpack.c.l.b16 %v292
        %v397 = vunpack.c.h.b16 %v292
        %v398 = vunpack.c.l.b16 %v293
        %v399 = vunpack.c.h.b16 %v293
        %v400 = vunpack.c.l.b16 %v294
        %v401 = vunpack.c.h.b16 %v294
        %v402 = vunpack.c.l.b16 %v295
        %v403 = vunpack.c.h.b16 %v295
        %v404 = vunpack.c.l.b16 %v296
        %v405 = vunpack.c.h.b16 %v296
        %v406 = vunpack.c.l.b16 %v297
        %v407 = vunpack.c.h.b16 %v297
        %v408 = vunpack.c.l.b16 %v298
        %v409 = vunpack.c.h.b16 %v298
        %v410 = vunpack.c.l.b16 %v299
        %v411 = vunpack.c.h.b16 %v299
        %v412 = vunpack.c.l.b16 %v300
        %v413 = vunpack.c.h.b16 %v300
        %v414 = vunpack.c.l.b16 %v301
        %v415 = vunpack.c.h.b16 %v301
        %v416 = vunpack.c.l.b16 %v302
        %v417 = vunpack.c.h.b16 %v302
        %v418 = vunpack.c.l.b16 %v303
        %v419 = vunpack.c.h.b16 %v303
        %v420 = vunpack.c.l.b16 %v304
        %v421 = vunpack.c.h.b16 %v304
        %v422 = vunpack.c.l.b16 %v305
        %v423 = vunpack.c.h.b16 %v305
        %v424 = vpack.c.b16 %v364, %v360
        %v425 = vpack.c.b16 %v365, %v361
        %v426 = vpack.c.b16 %v366, %v362
        %v427 = vpack.c.b16 %v367, %v363
        %v428 = vpack.c.b16 %v372, %v368
        %v429 = vpack.c.b16 %v373, %v369
        %v430 = vpack.c.b16 %v374, %v370
        %v431 = vpack.c.b16 %v375, %v371
        %v432 = vpack.c.b16 %v380, %v376
        %v433 = vpack.c.b16 %v381, %v377
        %v434 = vpack.c.b16 %v382, %v378
        %v435 = vpack.c.b16 %v383, %v379
        %v436 = vpack.c.b16 %v388, %v384
        %v437 = vpack.c.b16 %v389, %v385
        %v438 = vpack.c.b16 %v390, %v386
        %v439 = vpack.c.b16 %v391, %v387
        %v440 = vpack.c.b16 %v396, %v392
        %v441 = vpack.c.b16 %v397, %v393
        %v442 = vpack.c.b16 %v398, %v394
        %v443 = vpack.c.b16 %v399, %v395
        %v444 = vpack.c.b16 %v404, %v400
        %v445 = vpack.c.b16 %v405, %v401
        %v446 = vpack.c.b16 %v406, %v402
        %v447 = vpack.c.b16 %v407, %v403
        %v448 = vpack.c.b16 %v412, %v408
        %v449 = vpack.c.b16 %v413, %v409
        %v450 = vpack.c.b16 %v414, %v410
        %v451 = vpack.c.b16 %v415, %v411
        %v452 = vpack.c.b16 %v420, %v416
        %v453 = vpack.c.b16 %v421, %v417
        %v454 = vpack.c.b16 %v422, %v418
        %v455 = vpack.c.b16 %v423, %v419
        %488 = vmatprep.subr.bf16.mxu0 %v425
        %489 = vmatpush1.bf16.msra.mxu0 %v424
        %490 = vmatprep.subr.bf16.mxu0 %v429
        %491 = vmatpush1.bf16.msra.mxu0 %v428
        %492 = vmatprep.subr.bf16.mxu0 %v433
        %493 = vmatpush1.bf16.msra.mxu0 %v432
        %494 = vmatprep.subr.bf16.mxu0 %v437
        %495 = vmatpush1.bf16.msra.mxu0 %v436
        %496 = vmatprep.subr.bf16.mxu0 %v441
        %497 = vmatpush1.bf16.msra.mxu0 %v440
        %498 = vmatprep.subr.bf16.mxu0 %v445
        %499 = vmatpush1.bf16.msra.mxu0 %v444
        %500 = vmatprep.subr.bf16.mxu0 %v449
        %501 = vmatpush1.bf16.msra.mxu0 %v448
        %502 = vmatprep.subr.bf16.mxu0 %v453
        %503 = vmatpush1.bf16.msra.mxu0 %v452
        %504 = vmatprep.subr.bf16.mxu0 0
        %505 = vmatpush1.bf16.msra.mxu0 0
        %506 = vmatprep.subr.bf16.mxu0 0
        %507 = vmatpush1.bf16.msra.mxu0 0
        %508 = vmatprep.subr.bf16.mxu0 0
        %509 = vmatpush1.bf16.msra.mxu0 0
        %510 = vmatprep.subr.bf16.mxu0 0
        %511 = vmatpush1.bf16.msra.mxu0 0
        %512 = vmatprep.subr.bf16.mxu0 0
        %513 = vmatpush1.bf16.msra.mxu0 0
        %514 = vmatprep.subr.bf16.mxu0 0
        %515 = vmatpush1.bf16.msra.mxu0 0
        %516 = vmatprep.subr.bf16.mxu0 0
        %517 = vmatpush1.bf16.msra.mxu0 0
        %518 = vmatprep.subr.bf16.mxu0 0
        %519 = vmatpush1.bf16.msra.mxu0 0
        %520 = vmatprep.mubr.bf16.mxu0 0
        %521 = vmatmul.mubr.bf16.gmra.mrb[0].mxu0 %v273
        %v522 = vpop.f32.mrb[0].mxu0
        %v523 = vadd.f32 %v311, %v522
        %v524 = vpop.f32.mrb[0].mxu0
        %v525 = vadd.f32 %v315, %v524
        %v526 = vpop.f32.mrb[0].mxu0
        %v527 = vpop.f32.mrb[0].mxu0
        %528 = vdwg.mxu0
        %529 = vmatprep.subr.bf16.mxu0 %v427
        %530 = vmatpush1.bf16.msra.mxu0 %v426
        %531 = vmatprep.subr.bf16.mxu0 %v431
        %532 = vmatpush1.bf16.msra.mxu0 %v430
        %533 = vmatprep.subr.bf16.mxu0 %v435
        %534 = vmatpush1.bf16.msra.mxu0 %v434
        %535 = vmatprep.subr.bf16.mxu0 %v439
        %536 = vmatpush1.bf16.msra.mxu0 %v438
        %537 = vmatprep.subr.bf16.mxu0 %v443
        %538 = vmatpush1.bf16.msra.mxu0 %v442
        %539 = vmatprep.subr.bf16.mxu0 %v447
        %540 = vmatpush1.bf16.msra.mxu0 %v446
        %541 = vmatprep.subr.bf16.mxu0 %v451
        %542 = vmatpush1.bf16.msra.mxu0 %v450
        %543 = vmatprep.subr.bf16.mxu0 %v455
        %544 = vmatpush1.bf16.msra.mxu0 %v454
        %545 = vmatprep.subr.bf16.mxu0 0
        %546 = vmatpush1.bf16.msra.mxu0 0
        %547 = vmatprep.subr.bf16.mxu0 0
        %548 = vmatpush1.bf16.msra.mxu0 0
        %549 = vmatprep.subr.bf16.mxu0 0
        %550 = vmatpush1.bf16.msra.mxu0 0
        %551 = vmatprep.subr.bf16.mxu0 0
        %552 = vmatpush1.bf16.msra.mxu0 0
        %553 = vmatprep.subr.bf16.mxu0 0
        %554 = vmatpush1.bf16.msra.mxu0 0
        %555 = vmatprep.subr.bf16.mxu0 0
        %556 = vmatpush1.bf16.msra.mxu0 0
        %557 = vmatprep.subr.bf16.mxu0 0
        %558 = vmatpush1.bf16.msra.mxu0 0
        %559 = vmatprep.subr.bf16.mxu0 0
        %560 = vmatpush1.bf16.msra.mxu0 0
        %561 = vmatprep.mubr.bf16.mxu0 0
        %562 = vmatmul.mubr.bf16.gmra.mrb[0].mxu0 %v273
        %v563 = vpop.f32.mrb[0].mxu0
        %v564 = vadd.f32 %v319, %v563
        %v565 = vpop.f32.mrb[0].mxu0
        %v566 = vadd.f32 %v323, %v565
        %v567 = vpop.f32.mrb[0].mxu0
        %v568 = vpop.f32.mrb[0].mxu0
        %569 = vdwg.mxu0
        %v574 = vcombine.low %v523, %v525
        %v575 = vcombine.low %v564, %v566
        %v577 = vunpack.c.l.s4 1983009808
        %v578 = vunpack.c.0.s8 %v577
        %v579 = vlaneseq
        %v580 = vshrl.u32 %v579, 7
        %v581 = vsub.s32 %v578, %v580
        %v582 = vrot.slane %v574, %v581
        %v584 = vunpack.c.l.s4 1983009808
        %v585 = vunpack.c.0.s8 %v584
        %v586 = vlaneseq
        %v587 = vshrl.u32 %v586, 7
        %v588 = vsub.s32 %v585, %v587
        %v589 = vrot.slane %v575, %v588
        %v590 = vcombine.low %v582, %v589
        %592 = vst [vmem:[%s264] sm:$0xff] %v590
        %s593 = sand.u32 %s98, 1
        %s594 = scalar_lea.sflag [#allocation4], %s593
        %s595 = sand.u32 %s98, 1
        %s596 = smul.addr %s595, 8
        %s597 = scalar_lea.vmem [#allocation3], %s596
        // Predicated region
        $region56: #{decoder_forward.3} parent=50 // pred_check
          %p598 = pneg %p108
        $region57: #{decoder_forward.3} parent=50 // pred_check_branch
          %600 = sbr.rel (%p598) target = $region59
        $region58: #{decoder_forward.3} parent=50 // pred_region
          %s601 = smul.u32 4, %s17
          %s603 = ssub.s32 128, 128
          %604 = vsyncadd %s594, %s603
          %s605 = smul.addr %s601, 32
          %s606 = scalar_lea.hbm %s3, %s605
          %s608 = sshll.u32 %s597, 4
          %s609 = int_to_ptr.vmem [resolvable:$true] %s608
          %611 = dma.vmem_to_hbm [thread:$0]  %s609, 128, %s606, %s594
        $region59: #{decoder_forward.3} parent=50 // pred_fallthru
          _
      $region51: #{decoder_forward.3} parent=5 // pred_fallthru
        _
      %p612 = scmp.le.s32.totalorder 2, %s12
      // Predicated region
      $region60: #{decoder_forward.3} parent=5 // pred_check
        %p613 = pneg %p612
      $region61: #{decoder_forward.3} parent=5 // pred_check_branch
        %615 = sbr.rel (%p613) target = $region63
      $region62: #{decoder_forward.3} parent=5 // pred_region
        %s616 = ssub.s32 %s12, 2
        // Predicated region
        $region64: #{decoder_forward.3} parent=62 // pred_check
          %p617 = pneg %p114
        $region65: #{decoder_forward.3} parent=62 // pred_check_branch
          %619 = sbr.rel (%p617) target = $region67
        $region66: #{decoder_forward.3} parent=62 // pred_region
          %s620 = sand.u32 %s99, 1
          %s621 = scalar_lea.sflag [#allocation4], %s620
          %s622 = sand.u32 %s99, 1
          %s623 = smul.addr %s622, 8
          %s624 = scalar_lea.vmem [#allocation3], %s623
          %625 = dma.done %s621, 128
        $region67: #{decoder_forward.3} parent=62 // pred_fallthru
          _
      $region63: #{decoder_forward.3} parent=5 // pred_fallthru
        _
    $region6: #{decoder_forward.3} parent=1 // loop_footer
      %s16 = sadd.s32 1, %s12
    $region7: #{decoder_forward.3} parent=1 // loop_footer_branch
      %11 = sbr.rel target = $region3
    $region8: #{decoder_forward.3} parent=1 // loop_exit
      _
    %626 = vsyncpa [#allocation4], 1
    %s627 = scalar_lea.sflag [#allocation4], 1
    %628 = vsyncpa %s627, 1

// kernel: decoder_forward.2
$region0: #{decoder_forward.2}
  #allocation0 [shape = 'u32[]', space=smem, size = 0x4, offset = 0x4, fixed_abs, tag = 'smem constant byte address 0x4 - core index']
  #allocation1 [shape = 'u32[144,128]{1,0:T(1,128)}', space=vmem, size = 0x12000, scoped, tag = 'internal scratch']
  #allocation2 [shape = 'f32[2,32]{1,0:T(2,128)}', space=vmem, size = 0x400, scoped, tag = 'scratch operand']
  #allocation3 [shape = 's32[2]{0}', space=sflag, size = 0x8, scoped, tag = 'scratch operand']
  #allocation10 [shape = 's32[]', space=sflag, size = 0x4, offset = 0, fixed_abs, tag = 'sflag constant byte address 0x0 - dummy sync flag']
  #allocation11 [shape = 's32[]', space=sflag, size = 0x4, offset = 0, fixed_abs, tag = 'sflag constant byte address 0x0 - dummy sync flag']
  %s0 = inlined_call_operand.vmem [shape: s32[2], index: 0, kind: input, shape index: {}]
  %s1 = inlined_call_operand.vmem [shape: f32[1024,32], index: 1, kind: input, shape index: {}]
  %s2 = inlined_call_operand.vmem [shape: f32[2,32], index: 2, kind: input, shape index: {}]
  %s3 = inlined_call_operand.vmem [shape: f32[2,8,64], index: 3, kind: input, shape index: {}]
  %s4 = inlined_call_operand.vmem [shape: f32[32,32], index: 4, kind: input, shape index: {}]
  %s5 = inlined_call_operand.vmem [shape: f32[64,32], index: 5, kind: input, shape index: {}]
  %s6 = inlined_call_operand.vmem [shape: f32[1,32], index: 6, kind: input, shape index: {}]
  %s7 = inlined_call_operand.vmem [shape: f32[1,32], index: 7, kind: input, shape index: {}]
  %s8 = inlined_call_operand.vmem [shape: f32[96,96], index: 8, kind: input, shape index: {}]
  %s9 = inlined_call_operand.vmem [shape: f32[32,96], index: 9, kind: input, shape index: {}]
  %s10 = inlined_call_operand.vmem [shape: f32[1,96], index: 10, kind: input, shape index: {}]
  %s11 = inlined_call_operand.vmem [shape: f32[1,96], index: 11, kind: input, shape index: {}]
  %s12 = inlined_call_operand.vmem [shape: bf16[2,128], index: 12, kind: output, shape index: {0}]
  %s13 = inlined_call_operand.hbm [shape: f32[2,32], index: 13, kind: output, shape index: {1}]
  %s14 = inlined_call_operand.hbm [shape: f32[2,8], index: 14, kind: output, shape index: {2}]
  %15 = xla_tuple %s12, %s13, %s14
  %s16 = sld [smem:[#allocation0]]
  $region134: #{decoder_forward.2} parent=0
    _
  %s18 = ssub.s32 1, %s16
  %s19 = scalar_select 0, %s18, %s16
  $region1: #{decoder_forward.2} parent=0
    #allocation4 [shape = 'u8[512]{0}', space=smem, size = 0x200, scoped, tag = 'input window, operand 0, single buffered']
    #allocation5 [shape = 's32[1]{0}', space=sflag, size = 0x4, scoped, tag = 'scoped memory for decoder_forward.2']
    #allocation6 [shape = 's32[1]{0}', space=sflag, size = 0x4, scoped, tag = 'scoped memory for decoder_forward.2']
    #allocation7 [shape = 'u8[1024]{0}', space=vmem, size = 0x400, scoped, tag = 'output window, operand 1, single buffered']
    #allocation8 [shape = 'u8[1024]{0}', space=vmem, size = 0x400, scoped, tag = 'output window, operand 2, single buffered']
    #allocation9 [shape = 's32[1]{0}', space=sflag, size = 0x4, scoped, tag = 'scoped memory for decoder_forward.2']
    %20 = vsyncpa [#allocation6], 0
    %21 = vsyncpa [#allocation5], 0
    %22 = vsyncpa [#allocation9], 0
    // Predicated region
    $region2: #{decoder_forward.2} parent=1 // pred_check
      _
    $region3: #{decoder_forward.2} parent=1 // pred_check_branch
      %24 = sbr.rel (0) target = $region5
    $region4: #{decoder_forward.2} parent=1 // pred_region
      %s26 = ssub.s32 16, 16
      %27 = vsyncadd [#allocation6], %s26
      %s29 = sshll.u32 %s0, 4
      %s30 = int_to_ptr.vmem [resolvable:$true] %s29
      %32 = dma.vmem_to_smem %s30, 16, [#allocation4], [#allocation6]
    $region5: #{decoder_forward.2} parent=1 // pred_fallthru
      _
    // Predicated region
    $region6: #{decoder_forward.2} parent=1 // pred_check
      _
    $region7: #{decoder_forward.2} parent=1 // pred_check_branch
      %34 = sbr.rel (0) target = $region9
    $region8: #{decoder_forward.2} parent=1 // pred_region
      _
    $region9: #{decoder_forward.2} parent=1 // pred_fallthru
      _
    // Predicated region
    $region10: #{decoder_forward.2} parent=1 // pred_check
      _
    $region11: #{decoder_forward.2} parent=1 // pred_check_branch
      %36 = sbr.rel (0) target = $region13
    $region12: #{decoder_forward.2} parent=1 // pred_region
      _
    $region13: #{decoder_forward.2} parent=1 // pred_fallthru
      _
    // Predicated region
    $region14: #{decoder_forward.2} parent=1 // pred_check
      _
    $region15: #{decoder_forward.2} parent=1 // pred_check_branch
      %38 = sbr.rel (0) target = $region17
    $region16: #{decoder_forward.2} parent=1 // pred_region
      _
    $region17: #{decoder_forward.2} parent=1 // pred_fallthru
      _
    // Predicated region
    $region18: #{decoder_forward.2} parent=1 // pred_check
      _
    $region19: #{decoder_forward.2} parent=1 // pred_check_branch
      %40 = sbr.rel (0) target = $region21
    $region20: #{decoder_forward.2} parent=1 // pred_region
      _
    $region21: #{decoder_forward.2} parent=1 // pred_fallthru
      _
    // Predicated region
    $region22: #{decoder_forward.2} parent=1 // pred_check
      _
    $region23: #{decoder_forward.2} parent=1 // pred_check_branch
      %42 = sbr.rel (0) target = $region25
    $region24: #{decoder_forward.2} parent=1 // pred_region
      _
    $region25: #{decoder_forward.2} parent=1 // pred_fallthru
      _
    // Predicated region
    $region26: #{decoder_forward.2} parent=1 // pred_check
      _
    $region27: #{decoder_forward.2} parent=1 // pred_check_branch
      %44 = sbr.rel (0) target = $region29
    $region28: #{decoder_forward.2} parent=1 // pred_region
      _
    $region29: #{decoder_forward.2} parent=1 // pred_fallthru
      _
    // Predicated region
    $region30: #{decoder_forward.2} parent=1 // pred_check
      _
    $region31: #{decoder_forward.2} parent=1 // pred_check_branch
      %46 = sbr.rel (0) target = $region33
    $region32: #{decoder_forward.2} parent=1 // pred_region
      _
    $region33: #{decoder_forward.2} parent=1 // pred_fallthru
      _
    // Predicated region
    $region34: #{decoder_forward.2} parent=1 // pred_check
      _
    $region35: #{decoder_forward.2} parent=1 // pred_check_branch
      %48 = sbr.rel (0) target = $region37
    $region36: #{decoder_forward.2} parent=1 // pred_region
      _
    $region37: #{decoder_forward.2} parent=1 // pred_fallthru
      _
    // Predicated region
    $region38: #{decoder_forward.2} parent=1 // pred_check
      _
    $region39: #{decoder_forward.2} parent=1 // pred_check_branch
      %50 = sbr.rel (0) target = $region41
    $region40: #{decoder_forward.2} parent=1 // pred_region
      _
    $region41: #{decoder_forward.2} parent=1 // pred_fallthru
      _
    // Predicated region
    $region42: #{decoder_forward.2} parent=1 // pred_check
      _
    $region43: #{decoder_forward.2} parent=1 // pred_check_branch
      %52 = sbr.rel (0) target = $region45
    $region44: #{decoder_forward.2} parent=1 // pred_region
      _
    $region45: #{decoder_forward.2} parent=1 // pred_fallthru
      _
    // Predicated region
    $region46: #{decoder_forward.2} parent=1 // pred_check
      _
    $region47: #{decoder_forward.2} parent=1 // pred_check_branch
      %54 = sbr.rel (0) target = $region49
    $region48: #{decoder_forward.2} parent=1 // pred_region
      %55 = dma.done [#allocation6], 16
    $region49: #{decoder_forward.2} parent=1 // pred_fallthru
      _
    %56 = sfence
    %s57 = sld [smem:[#allocation4]]
    %s58 = scalar_lea.vmem %s1, %s57
    %p60 = scmp.lt.u32.totalorder 1, 8
    %p61 = pneg %p60
    // Predicated region
    $region50: #{decoder_forward.2} parent=1 // pred_check
      _
    $region51: #{decoder_forward.2} parent=1 // pred_check_branch
      %63 = sbr.rel (%p60) target = $region53
    $region52: #{decoder_forward.2} parent=1 // pred_region
      %s78 = sand.u32 1, 7
      %p79 = scmp.eq.s32.totalorder %s78, 0
      %p80 = pneg %p79
      // Predicated region
      $region65: #{decoder_forward.2} parent=52 // pred_check
        _
      $region66: #{decoder_forward.2} parent=52 // pred_check_branch
        %82 = sbr.rel (%p79) target = $region68
      $region67: #{decoder_forward.2} parent=52 // pred_region
        %s83 = sand.u32 1, 7
        %s84 = ssub.s32 1, %s83
        %s85 = scalar_lea.vmem %s58, %s84
        %s86 = ssub.s32 1, %s83
        %s87 = scalar_lea.vmem [#allocation2], %s86
        %s88 = sshllo.u32 0, %s83
        loop: start=0, step=1, limit=1
        $region69: #{decoder_forward.2} parent=67 // loop_pre_header
          _
        $region70: #{decoder_forward.2} parent=67 // loop_header
          %s90 = sphi 0, %s94
          %p91 = scmp.ge.s32.totalorder %s90, 1
          %s95 = sphi %s85, %s85
          %s96 = sphi %s87, %s87
        $region71: #{decoder_forward.2} parent=67 // loop_header_branch
          %93 = sbr.rel (%p91) target = $region75
        $region72: #{decoder_forward.2} parent=67 // loop_body
          %v97 = vld [vmem:[%s95] sm:%s88]
          %98 = vst [vmem:[%s96] sm:%s88] %v97
        $region73: #{decoder_forward.2} parent=67 // loop_footer
          %s94 = sadd.s32 1, %s90
        $region74: #{decoder_forward.2} parent=67 // loop_footer_branch
          %89 = sbr.rel target = $region70
        $region75: #{decoder_forward.2} parent=67 // loop_exit
          _
      $region68: #{decoder_forward.2} parent=52 // pred_fallthru
        _
    $region53: #{decoder_forward.2} parent=1 // pred_fallthru
      _
    // Predicated region
    $region54: #{decoder_forward.2} parent=1 // pred_check
      %p64 = pneg %p60
    $region55: #{decoder_forward.2} parent=1 // pred_check_branch
      %66 = sbr.rel (%p64) target = $region57
    $region56: #{decoder_forward.2} parent=1 // pred_region
      %s67 = sshllo.u32 0, 1
      loop: start=0, step=1, limit=1
      $region58: #{decoder_forward.2} parent=56 // loop_pre_header
        _
      $region59: #{decoder_forward.2} parent=56 // loop_header
        %s69 = sphi 0, %s73
        %p70 = scmp.ge.s32.totalorder %s69, 1
        %s74 = sphi %s58, %s58
        %s75 = sphi [#allocation2], [#allocation2]
      $region60: #{decoder_forward.2} parent=56 // loop_header_branch
        %72 = sbr.rel (%p70) target = $region64
      $region61: #{decoder_forward.2} parent=56 // loop_body
        %v76 = vld [vmem:[%s74] sm:%s67]
        %77 = vst [vmem:[%s75] sm:%s67] %v76
      $region62: #{decoder_forward.2} parent=56 // loop_footer
        %s73 = sadd.s32 1, %s69
      $region63: #{decoder_forward.2} parent=56 // loop_footer_branch
        %68 = sbr.rel target = $region59
      $region64: #{decoder_forward.2} parent=56 // loop_exit
        _
    $region57: #{decoder_forward.2} parent=1 // pred_fallthru
      _
    // Predicated region
    $region76: #{decoder_forward.2} parent=1 // pred_check
      _
    $region77: #{decoder_forward.2} parent=1 // pred_check_branch
      %101 = sbr.rel (0) target = $region79
    $region78: #{decoder_forward.2} parent=1 // pred_region
      %102 = vsyncadd [#allocation3], 16
    $region79: #{decoder_forward.2} parent=1 // pred_fallthru
      _
    %s103 = sld [smem:[#allocation4 + $0x1]]
    %s104 = scalar_lea.vmem %s1, %s103
    %s105 = scalar_lea.vmem [#allocation2], 1
    %s106 = scalar_lea.sflag [#allocation3], 1
    %p108 = scmp.lt.u32.totalorder 1, 8
    %p109 = pneg %p108
    // Predicated region
    $region80: #{decoder_forward.2} parent=1 // pred_check
      _
    $region81: #{decoder_forward.2} parent=1 // pred_check_branch
      %111 = sbr.rel (%p108) target = $region83
    $region82: #{decoder_forward.2} parent=1 // pred_region
      %s126 = sand.u32 1, 7
      %p127 = scmp.eq.s32.totalorder %s126, 0
      %p128 = pneg %p127
      // Predicated region
      $region95: #{decoder_forward.2} parent=82 // pred_check
        _
      $region96: #{decoder_forward.2} parent=82 // pred_check_branch
        %130 = sbr.rel (%p127) target = $region98
      $region97: #{decoder_forward.2} parent=82 // pred_region
        %s131 = sand.u32 1, 7
        %s132 = ssub.s32 1, %s131
        %s133 = scalar_lea.vmem %s104, %s132
        %s134 = ssub.s32 1, %s131
        %s135 = scalar_lea.vmem %s105, %s134 [#allocation2]
        %s136 = sshllo.u32 0, %s131
        loop: start=0, step=1, limit=1
        $region99: #{decoder_forward.2} parent=97 // loop_pre_header
          _
        $region100: #{decoder_forward.2} parent=97 // loop_header
          %s138 = sphi 0, %s142
          %p139 = scmp.ge.s32.totalorder %s138, 1
          %s143 = sphi %s133, %s133
          %s144 = sphi %s135, %s135
        $region101: #{decoder_forward.2} parent=97 // loop_header_branch
          %141 = sbr.rel (%p139) target = $region105
        $region102: #{decoder_forward.2} parent=97 // loop_body
          %v145 = vld [vmem:[%s143] sm:%s136]
          %146 = vst [vmem:[%s144] sm:%s136] %v145
        $region103: #{decoder_forward.2} parent=97 // loop_footer
          %s142 = sadd.s32 1, %s138
        $region104: #{decoder_forward.2} parent=97 // loop_footer_branch
          %137 = sbr.rel target = $region100
        $region105: #{decoder_forward.2} parent=97 // loop_exit
          _
      $region98: #{decoder_forward.2} parent=82 // pred_fallthru
        _
    $region83: #{decoder_forward.2} parent=1 // pred_fallthru
      _
    // Predicated region
    $region84: #{decoder_forward.2} parent=1 // pred_check
      %p112 = pneg %p108
    $region85: #{decoder_forward.2} parent=1 // pred_check_branch
      %114 = sbr.rel (%p112) target = $region87
    $region86: #{decoder_forward.2} parent=1 // pred_region
      %s115 = sshllo.u32 0, 1
      loop: start=0, step=1, limit=1
      $region88: #{decoder_forward.2} parent=86 // loop_pre_header
        _
      $region89: #{decoder_forward.2} parent=86 // loop_header
        %s117 = sphi 0, %s121
        %p118 = scmp.ge.s32.totalorder %s117, 1
        %s122 = sphi %s104, %s104
        %s123 = sphi %s105, %s105
      $region90: #{decoder_forward.2} parent=86 // loop_header_branch
        %120 = sbr.rel (%p118) target = $region94
      $region91: #{decoder_forward.2} parent=86 // loop_body
        %v124 = vld [vmem:[%s122] sm:%s115]
        %125 = vst [vmem:[%s123] sm:%s115] %v124
      $region92: #{decoder_forward.2} parent=86 // loop_footer
        %s121 = sadd.s32 1, %s117
      $region93: #{decoder_forward.2} parent=86 // loop_footer_branch
        %116 = sbr.rel target = $region89
      $region94: #{decoder_forward.2} parent=86 // loop_exit
        _
    $region87: #{decoder_forward.2} parent=1 // pred_fallthru
      _
    // Predicated region
    $region106: #{decoder_forward.2} parent=1 // pred_check
      _
    $region107: #{decoder_forward.2} parent=1 // pred_check_branch
      %149 = sbr.rel (0) target = $region109
    $region108: #{decoder_forward.2} parent=1 // pred_region
      %150 = vsyncadd %s106, 16
    $region109: #{decoder_forward.2} parent=1 // pred_fallthru
      _
    %v151 = vld [vmem:[%s2] sm:$0x3]
    %v152 = vld [vmem:[%s3] sm:$0xff]
    %v153 = vld [vmem:[%s3 + $0x8] sm:$0xff]
    %v154 = vld [vmem:[%s4] sm:$0xff]
    %v155 = vld [vmem:[%s4 + $0x8] sm:$0xff]
    %v156 = vld [vmem:[%s4 + $0x10] sm:$0xff]
    %v157 = vld [vmem:[%s4 + $0x18] sm:$0xff]
    %vm158 = vcmask 261120
    %v160 = vsel %vm158, %v151, 0
    %162 = vmatprep.subr.mxu0 0.0
    %163 = vmatpush1.msra.mxu0 %v154
    %164 = vmatprep.subr.mxu0 0.0
    %165 = vmatpush1.msra.mxu0 %v155
    %166 = vmatprep.subr.mxu0 0.0
    %167 = vmatpush1.msra.mxu0 %v156
    %168 = vmatprep.subr.mxu0 0.0
    %169 = vmatpush1.msra.mxu0 %v157
    %170 = vmatprep.subr.mxu0 0.0
    %171 = vmatpush1.msra.mxu0 0.0
    %172 = vmatprep.subr.mxu0 0.0
    %173 = vmatpush1.msra.mxu0 0.0
    %174 = vmatprep.subr.mxu0 0.0
    %175 = vmatpush1.msra.mxu0 0.0
    %176 = vmatprep.subr.mxu0 0.0
    %177 = vmatpush1.msra.mxu0 0.0
    %178 = vmatprep.subr.mxu0 0.0
    %179 = vmatpush1.msra.mxu0 0.0
    %180 = vmatprep.subr.mxu0 0.0
    %181 = vmatpush1.msra.mxu0 0.0
    %182 = vmatprep.subr.mxu0 0.0
    %183 = vmatpush1.msra.mxu0 0.0
    %184 = vmatprep.subr.mxu0 0.0
    %185 = vmatpush1.msra.mxu0 0.0
    %186 = vmatprep.subr.mxu0 0.0
    %187 = vmatpush1.msra.mxu0 0.0
    %188 = vmatprep.subr.mxu0 0.0
    %189 = vmatpush1.msra.mxu0 0.0
    %190 = vmatprep.subr.mxu0 0.0
    %191 = vmatpush1.msra.mxu0 0.0
    %192 = vmatprep.subr.mxu0 0.0
    %193 = vmatpush1.msra.mxu0 0.0
    %194 = vmatprep.subr.mxu0 0.0
    %195 = vmatpush1.msra.mxu0 0.0
    %196 = vmatprep.subr.mxu0 0.0
    %197 = vmatpush1.msra.mxu0 0.0
    %198 = vmatprep.subr.mxu0 0.0
    %199 = vmatpush1.msra.mxu0 0.0
    %200 = vmatprep.subr.mxu0 0.0
    %201 = vmatpush1.msra.mxu0 0.0
    %202 = vmatprep.subr.mxu0 0.0
    %203 = vmatpush1.msra.mxu0 0.0
    %204 = vmatprep.subr.mxu0 0.0
    %205 = vmatpush1.msra.mxu0 0.0
    %206 = vmatprep.subr.mxu0 0.0
    %207 = vmatpush1.msra.mxu0 0.0
    %208 = vmatprep.subr.mxu0 0.0
    %209 = vmatpush1.msra.mxu0 0.0
    %210 = vmatprep.subr.mxu0 0.0
    %211 = vmatpush1.msra.mxu0 0.0
    %212 = vmatprep.subr.mxu0 0.0
    %213 = vmatpush1.msra.mxu0 0.0
    %214 = vmatprep.subr.mxu0 0.0
    %215 = vmatpush1.msra.mxu0 0.0
    %216 = vmatprep.subr.mxu0 0.0
    %217 = vmatpush1.msra.mxu0 0.0
    %218 = vmatprep.subr.mxu0 0.0
    %219 = vmatpush1.msra.mxu0 0.0
    %220 = vmatprep.subr.mxu0 0.0
    %221 = vmatpush1.msra.mxu0 0.0
    %222 = vmatprep.subr.mxu0 0.0
    %223 = vmatpush1.msra.mxu0 0.0
    %224 = vmatprep.subr.mxu0 0.0
    %225 = vmatpush1.msra.mxu0 0.0
    %226 = vmatprep.mubr.f32.mxu0 0.0
    %227 = vmatmul.mubr.f32.gmra.mrb[0].mxu0 %v160
    %v228 = vpop.f32.mrb[0].mxu0
    %v229 = vadd.f32 0.0, %v228
    %v230 = vpop.f32.mrb[0].mxu0
    %231 = vdwg.mxu0
    %v232 = vld [vmem:[%s5] sm:$0xff]
    %v233 = vld [vmem:[%s5 + $0x8] sm:$0xff]
    %v234 = vld [vmem:[%s5 + $0x10] sm:$0xff]
    %v235 = vld [vmem:[%s5 + $0x18] sm:$0xff]
    %v236 = vld [vmem:[%s5 + $0x20] sm:$0xff]
    %v237 = vld [vmem:[%s5 + $0x28] sm:$0xff]
    %v238 = vld [vmem:[%s5 + $0x30] sm:$0xff]
    %v239 = vld [vmem:[%s5 + $0x38] sm:$0xff]
    %vm240 = vcmask 523264
    %v242 = vsel %vm240, %v152, 0
    %v245 = vsel %vm240, %v153, 0
    %247 = vmatprep.subr.mxu0 0.0
    %248 = vmatpush1.msra.mxu0 %v232
    %249 = vmatprep.subr.mxu0 0.0
    %250 = vmatpush1.msra.mxu0 %v233
    %251 = vmatprep.subr.mxu0 0.0
    %252 = vmatpush1.msra.mxu0 %v234
    %253 = vmatprep.subr.mxu0 0.0
    %254 = vmatpush1.msra.mxu0 %v235
    %255 = vmatprep.subr.mxu0 0.0
    %256 = vmatpush1.msra.mxu0 %v236
    %257 = vmatprep.subr.mxu0 0.0
    %258 = vmatpush1.msra.mxu0 %v237
    %259 = vmatprep.subr.mxu0 0.0
    %260 = vmatpush1.msra.mxu0 %v238
    %261 = vmatprep.subr.mxu0 0.0
    %262 = vmatpush1.msra.mxu0 %v239
    %263 = vmatprep.subr.mxu0 0.0
    %264 = vmatpush1.msra.mxu0 0.0
    %265 = vmatprep.subr.mxu0 0.0
    %266 = vmatpush1.msra.mxu0 0.0
    %267 = vmatprep.subr.mxu0 0.0
    %268 = vmatpush1.msra.mxu0 0.0
    %269 = vmatprep.subr.mxu0 0.0
    %270 = vmatpush1.msra.mxu0 0.0
    %271 = vmatprep.subr.mxu0 0.0
    %272 = vmatpush1.msra.mxu0 0.0
    %273 = vmatprep.subr.mxu0 0.0
    %274 = vmatpush1.msra.mxu0 0.0
    %275 = vmatprep.subr.mxu0 0.0
    %276 = vmatpush1.msra.mxu0 0.0
    %277 = vmatprep.subr.mxu0 0.0
    %278 = vmatpush1.msra.mxu0 0.0
    %279 = vmatprep.subr.mxu0 0.0
    %280 = vmatpush1.msra.mxu0 0.0
    %281 = vmatprep.subr.mxu0 0.0
    %282 = vmatpush1.msra.mxu0 0.0
    %283 = vmatprep.subr.mxu0 0.0
    %284 = vmatpush1.msra.mxu0 0.0
    %285 = vmatprep.subr.mxu0 0.0
    %286 = vmatpush1.msra.mxu0 0.0
    %287 = vmatprep.subr.mxu0 0.0
    %288 = vmatpush1.msra.mxu0 0.0
    %289 = vmatprep.subr.mxu0 0.0
    %290 = vmatpush1.msra.mxu0 0.0
    %291 = vmatprep.subr.mxu0 0.0
    %292 = vmatpush1.msra.mxu0 0.0
    %293 = vmatprep.subr.mxu0 0.0
    %294 = vmatpush1.msra.mxu0 0.0
    %295 = vmatprep.subr.mxu0 0.0
    %296 = vmatpush1.msra.mxu0 0.0
    %297 = vmatprep.subr.mxu0 0.0
    %298 = vmatpush1.msra.mxu0 0.0
    %299 = vmatprep.subr.mxu0 0.0
    %300 = vmatpush1.msra.mxu0 0.0
    %301 = vmatprep.subr.mxu0 0.0
    %302 = vmatpush1.msra.mxu0 0.0
    %303 = vmatprep.subr.mxu0 0.0
    %304 = vmatpush1.msra.mxu0 0.0
    %305 = vmatprep.subr.mxu0 0.0
    %306 = vmatpush1.msra.mxu0 0.0
    %307 = vmatprep.subr.mxu0 0.0
    %308 = vmatpush1.msra.mxu0 0.0
    %309 = vmatprep.subr.mxu0 0.0
    %310 = vmatpush1.msra.mxu0 0.0
    %311 = vmatprep.mubr.f32.mxu0 0.0
    %312 = vmatmul.mubr.f32.gmra.mrb[0].mxu0 %v242
    %v313 = vpop.f32.mrb[0].mxu0
    %v314 = vadd.f32 0.0, %v313
    %v315 = vpop.f32.mrb[0].mxu0
    %316 = vmatprep.mubr.f32.mxu0 0.0
    %317 = vmatmul.mubr.f32.gmra.mrb[0].mxu0 %v245
    %v318 = vpop.f32.mrb[0].mxu0
    %v319 = vadd.f32 0.0, %v318
    %v320 = vpop.f32.mrb[0].mxu0
    %321 = vdwg.mxu0
    %v324 = vunpack.c.l.s4 1966171168
    %v325 = vunpack.c.0.s8 %v324
    %v326 = vlaneseq
    %v327 = vshrl.u32 %v326, 7
    %v328 = vsub.s32 %v325, %v327
    %v329 = vrot.slane %v229, %v328
    %v330 = vcombine.high %v329, %v329
    %v332 = vunpack.c.l.s4 1966171168
    %v333 = vunpack.c.0.s8 %v332
    %v334 = vlaneseq
    %v335 = vshrl.u32 %v334, 7
    %v336 = vsub.s32 %v333, %v335
    %v337 = vrot.slane %v329, %v336
    %v339 = vunpack.c.l.s4 1966171168
    %v340 = vunpack.c.0.s8 %v339
    %v341 = vlaneseq
    %v342 = vshrl.u32 %v341, 7
    %v343 = vsub.s32 %v340, %v342
    %v344 = vrot.slane %v330, %v343
    %v345 = vlaneseq
    %v346 = vshrl.u32 %v345, 7
    %v347 = vsub.s32 0, %v346
    %v348 = vrot.slane %v337, %v347
    %v349 = vlaneseq
    %v350 = vshrl.u32 %v349, 7
    %v351 = vsub.s32 0, %v350
    %v352 = vrot.slane %v344, %v351
    %v355 = vadd.f32 %v314, %v348
    %v356 = vadd.f32 %v319, %v352
    %v357 = vld [vmem:[%s6] sm:$0x1]
    %v359 = vlaneseq
    %v360 = vshrl.u32 %v359, 7
    %v361 = vsub.s32 0, %v360
    %v362 = vrot.slane %v357, %v361
    %v364 = vadd.f32 %v355, %v362
    %v365 = vadd.f32 %v356, %v362
    %v366 = vtanh.pop %v364
    %v367 = vtanh.pop %v365
    %v368 = vld [vmem:[%s7] sm:$0x1]
    %v370 = vlaneseq
    %v371 = vshrl.u32 %v370, 7
    %v372 = vsub.s32 0, %v371
    %v373 = vrot.slane %v368, %v372
    %v375 = vmul.f32 %v366, %v373
    %v376 = vmul.f32 %v367, %v373
    %v377 = vsel %vm158, %v375, 0.0
    %378 = vadd.xlane.f32.xlu0 %v377
    %v379 = vpop.xlane.xlu0 %378
    %v380 = vsel %vm158, %v376, 0.0
    %381 = vadd.xlane.f32.xlu0 %v380
    %v382 = vpop.xlane.xlu0 %381
    %v385 = vlaneseq
    %v386 = vand.u32 %v385, 127
    %v387 = vlaneseq
    %v388 = vshrl.u32 %v387, 7
    %v389 = vsub.s32 %v386, %v388
    %v390 = vrot.slane %v379, %v389
    %v391 = vlaneseq
    %v392 = vshrl.u32 %v391, 7
    %v393 = vsub.s32 %v386, %v392
    %v394 = vrot.slane %v382, %v393
    %vm395 = vcmask 1041409
    %v396 = vsel %vm395, %v394, %v390
    %vm398 = vcmask 58368
    %v399 = vsel %vm398, %v396, -inf
    %400 = vmax.xlane.f32.xlu0 %v399
    %v401 = vpop.xlane.xlu0 %400
    %v403 = vlaneseq
    %v404 = vshrl.u32 %v403, 7
    %v405 = vsub.s32 0, %v404
    %v406 = vrot.slane %v401, %v405
    %v407 = vlaneseq
    %v408 = vshrl.u32 %v407, 7
    %v409 = vsub.s32 1, %v408
    %v410 = vrot.slane %v401, %v409
    %v413 = vsub.f32 %v379, %v406
    %v414 = vsub.f32 %v382, %v410
    %v415 = vmul.f32 %v413, 1.442695
    %v416 = vpow.pop %v415
    %v417 = vmul.f32 %v414, 1.442695
    %v418 = vpow.pop %v417
    %421 = vset.pattern.permute.xlu0 0
    %422 = vperm.xlu0 %421, %v416
    %v423 = vpop.permute.xlu0 %422
    %424 = vset.pattern.permute.xlu0 0
    %425 = vperm.xlu0 %424, %v418
    %v426 = vpop.permute.xlu0 %425
    %v427 = vlaneseq
    %v428 = vshrl.u32 %v427, 7
    %v429 = vsub.s32 %v386, %v428
    %v430 = vrot.slane %v423, %v429
    %v431 = vlaneseq
    %v432 = vshrl.u32 %v431, 7
    %v433 = vsub.s32 %v386, %v432
    %v434 = vrot.slane %v426, %v433
    %v435 = vsel %vm395, %v434, %v430
    %v437 = vsel %vm398, %v435, 0.0
    %438 = vadd.xlane.f32.xlu0 %v437
    %v439 = vpop.xlane.xlu0 %438
    %v440 = vrcp.pop %v439
    %v442 = vlaneseq
    %v443 = vshrl.u32 %v442, 7
    %v444 = vsub.s32 0, %v443
    %v445 = vrot.slane %v440, %v444
    %v446 = vlaneseq
    %v447 = vshrl.u32 %v446, 7
    %v448 = vsub.s32 1, %v447
    %v449 = vrot.slane %v440, %v448
    %v452 = vmul.f32 %v416, %v445
    %v453 = vmul.f32 %v418, %v449
    %456 = vset.pattern.permute.xlu0 0
    %457 = vperm.xlu0 %456, %v452
    %v458 = vpop.permute.xlu0 %457
    %459 = vset.pattern.permute.xlu0 0
    %460 = vperm.xlu0 %459, %v453
    %v461 = vpop.permute.xlu0 %460
    %v462 = vlaneseq
    %v463 = vshrl.u32 %v462, 7
    %v464 = vsub.s32 %v386, %v463
    %v465 = vrot.slane %v458, %v464
    %v466 = vlaneseq
    %v467 = vshrl.u32 %v466, 7
    %v468 = vsub.s32 %v386, %v467
    %v469 = vrot.slane %v461, %v468
    %v470 = vsel %vm395, %v469, %v465
    %472 = vst.msk [vmem:[#allocation8] sm:$0x3] %vm398, %v470
    %v475 = vmul.f32 %v458, %v152
    %v476 = vmul.f32 %v461, %v153
    %v477 = vsel %vm240, %v475, 0.0
    %v478 = vrot.slane %v477, 4
    %v479 = vadd.f32 %v477, %v478
    %v480 = vrot.slane %v479, 2
    %v481 = vadd.f32 %v479, %v480
    %v482 = vrot.slane %v481, 1
    %v483 = vadd.f32 %v481, %v482
    %v484 = vsel %vm240, %v476, 0.0
    %v485 = vrot.slane %v484, 4
    %v486 = vadd.f32 %v484, %v485
    %v487 = vrot.slane %v486, 2
    %v488 = vadd.f32 %v486, %v487
    %v489 = vrot.slane %v488, 1
    %v490 = vadd.f32 %v488, %v489
    %492 = dma.done [#allocation3], 16
    %494 = dma.done %s106, 16
    %v495 = vld [vmem:[#allocation2] sm:$0x3]
    %v498 = vsel %vm395, %v490, %v483
    %499 = vrot.lane.b32.xlu0 %v498, 32
    %v500 = vpop.permute.xlu0 %499
    %v502 = vsel %vm158, %v495, %v500
    %v503 = vld [vmem:[%s8] sm:$0xff]
    %v504 = vld [vmem:[%s8 + $0x8] sm:$0xff]
    %v505 = vld [vmem:[%s8 + $0x10] sm:$0xff]
    %v506 = vld [vmem:[%s8 + $0x18] sm:$0xff]
    %v507 = vld [vmem:[%s8 + $0x20] sm:$0xff]
    %v508 = vld [vmem:[%s8 + $0x28] sm:$0xff]
    %v509 = vld [vmem:[%s8 + $0x30] sm:$0xff]
    %v510 = vld [vmem:[%s8 + $0x38] sm:$0xff]
    %v511 = vld [vmem:[%s8 + $0x40] sm:$0xff]
    %v512 = vld [vmem:[%s8 + $0x48] sm:$0xff]
    %v513 = vld [vmem:[%s8 + $0x50] sm:$0xff]
    %v514 = vld [vmem:[%s8 + $0x58] sm:$0xff]
    %v515 = vld [vmem:[%s10] sm:$0x1]
    %v517 = vlaneseq
    %v518 = vshrl.u32 %v517, 7
    %v519 = vsub.s32 0, %v518
    %v520 = vrot.slane %v515, %v519
    %vm522 = vcmask 785408
    %v524 = vsel %vm522, %v502, 0
    %526 = vmatprep.subr.mxu0 0.0
    %527 = vmatpush1.msra.mxu0 %v503
    %528 = vmatprep.subr.mxu0 0.0
    %529 = vmatpush1.msra.mxu0 %v504
    %530 = vmatprep.subr.mxu0 0.0
    %531 = vmatpush1.msra.mxu0 %v505
    %532 = vmatprep.subr.mxu0 0.0
    %533 = vmatpush1.msra.mxu0 %v506
    %534 = vmatprep.subr.mxu0 0.0
    %535 = vmatpush1.msra.mxu0 %v507
    %536 = vmatprep.subr.mxu0 0.0
    %537 = vmatpush1.msra.mxu0 %v508
    %538 = vmatprep.subr.mxu0 0.0
    %539 = vmatpush1.msra.mxu0 %v509
    %540 = vmatprep.subr.mxu0 0.0
    %541 = vmatpush1.msra.mxu0 %v510
    %542 = vmatprep.subr.mxu0 0.0
    %543 = vmatpush1.msra.mxu0 %v511
    %544 = vmatprep.subr.mxu0 0.0
    %545 = vmatpush1.msra.mxu0 %v512
    %546 = vmatprep.subr.mxu0 0.0
    %547 = vmatpush1.msra.mxu0 %v513
    %548 = vmatprep.subr.mxu0 0.0
    %549 = vmatpush1.msra.mxu0 %v514
    %550 = vmatprep.subr.mxu0 0.0
    %551 = vmatpush1.msra.mxu0 0.0
    %552 = vmatprep.subr.mxu0 0.0
    %553 = vmatpush1.msra.mxu0 0.0
    %554 = vmatprep.subr.mxu0 0.0
    %555 = vmatpush1.msra.mxu0 0.0
    %556 = vmatprep.subr.mxu0 0.0
    %557 = vmatpush1.msra.mxu0 0.0
    %558 = vmatprep.subr.mxu0 0.0
    %559 = vmatpush1.msra.mxu0 0.0
    %560 = vmatprep.subr.mxu0 0.0
    %561 = vmatpush1.msra.mxu0 0.0
    %562 = vmatprep.subr.mxu0 0.0
    %563 = vmatpush1.msra.mxu0 0.0
    %564 = vmatprep.subr.mxu0 0.0
    %565 = vmatpush1.msra.mxu0 0.0
    %566 = vmatprep.subr.mxu0 0.0
    %567 = vmatpush1.msra.mxu0 0.0
    %568 = vmatprep.subr.mxu0 0.0
    %569 = vmatpush1.msra.mxu0 0.0
    %570 = vmatprep.subr.mxu0 0.0
    %571 = vmatpush1.msra.mxu0 0.0
    %572 = vmatprep.subr.mxu0 0.0
    %573 = vmatpush1.msra.mxu0 0.0
    %574 = vmatprep.subr.mxu0 0.0
    %575 = vmatpush1.msra.mxu0 0.0
    %576 = vmatprep.subr.mxu0 0.0
    %577 = vmatpush1.msra.mxu0 0.0
    %578 = vmatprep.subr.mxu0 0.0
    %579 = vmatpush1.msra.mxu0 0.0
    %580 = vmatprep.subr.mxu0 0.0
    %581 = vmatpush1.msra.mxu0 0.0
    %582 = vmatprep.subr.mxu0 0.0
    %583 = vmatpush1.msra.mxu0 0.0
    %584 = vmatprep.subr.mxu0 0.0
    %585 = vmatpush1.msra.mxu0 0.0
    %586 = vmatprep.subr.mxu0 0.0
    %587 = vmatpush1.msra.mxu0 0.0
    %588 = vmatprep.subr.mxu0 0.0
    %589 = vmatpush1.msra.mxu0 0.0
    %590 = vmatprep.mubr.f32.mxu0 0.0
    %591 = vmatmul.mubr.f32.gmra.mrb[0].mxu0 %v524
    %v592 = vpop.f32.mrb[0].mxu0
    %v593 = vadd.f32 %v520, %v592
    %v594 = vpop.f32.mrb[0].mxu0
    %595 = vdwg.mxu0
    %v596 = vld [vmem:[%s9] sm:$0xff]
    %v597 = vld [vmem:[%s9 + $0x8] sm:$0xff]
    %v598 = vld [vmem:[%s9 + $0x10] sm:$0xff]
    %v599 = vld [vmem:[%s9 + $0x18] sm:$0xff]
    %v600 = vld [vmem:[%s11] sm:$0x1]
    %v602 = vlaneseq
    %v603 = vshrl.u32 %v602, 7
    %v604 = vsub.s32 0, %v603
    %v605 = vrot.slane %v600, %v604
    %607 = vmatprep.subr.mxu0 0.0
    %608 = vmatpush1.msra.mxu0 %v596
    %609 = vmatprep.subr.mxu0 0.0
    %610 = vmatpush1.msra.mxu0 %v597
    %611 = vmatprep.subr.mxu0 0.0
    %612 = vmatpush1.msra.mxu0 %v598
    %613 = vmatprep.subr.mxu0 0.0
    %614 = vmatpush1.msra.mxu0 %v599
    %615 = vmatprep.subr.mxu0 0.0
    %616 = vmatpush1.msra.mxu0 0.0
    %617 = vmatprep.subr.mxu0 0.0
    %618 = vmatpush1.msra.mxu0 0.0
    %619 = vmatprep.subr.mxu0 0.0
    %620 = vmatpush1.msra.mxu0 0.0
    %621 = vmatprep.subr.mxu0 0.0
    %622 = vmatpush1.msra.mxu0 0.0
    %623 = vmatprep.subr.mxu0 0.0
    %624 = vmatpush1.msra.mxu0 0.0
    %625 = vmatprep.subr.mxu0 0.0
    %626 = vmatpush1.msra.mxu0 0.0
    %627 = vmatprep.subr.mxu0 0.0
    %628 = vmatpush1.msra.mxu0 0.0
    %629 = vmatprep.subr.mxu0 0.0
    %630 = vmatpush1.msra.mxu0 0.0
    %631 = vmatprep.subr.mxu0 0.0
    %632 = vmatpush1.msra.mxu0 0.0
    %633 = vmatprep.subr.mxu0 0.0
    %634 = vmatpush1.msra.mxu0 0.0
    %635 = vmatprep.subr.mxu0 0.0
    %636 = vmatpush1.msra.mxu0 0.0
    %637 = vmatprep.subr.mxu0 0.0
    %638 = vmatpush1.msra.mxu0 0.0
    %639 = vmatprep.subr.mxu0 0.0
    %640 = vmatpush1.msra.mxu0 0.0
    %641 = vmatprep.subr.mxu0 0.0
    %642 = vmatpush1.msra.mxu0 0.0
    %643 = vmatprep.subr.mxu0 0.0
    %644 = vmatpush1.msra.mxu0 0.0
    %645 = vmatprep.subr.mxu0 0.0
    %646 = vmatpush1.msra.mxu0 0.0
    %647 = vmatprep.subr.mxu0 0.0
    %648 = vmatpush1.msra.mxu0 0.0
    %649 = vmatprep.subr.mxu0 0.0
    %650 = vmatpush1.msra.mxu0 0.0
    %651 = vmatprep.subr.mxu0 0.0
    %652 = vmatpush1.msra.mxu0 0.0
    %653 = vmatprep.subr.mxu0 0.0
    %654 = vmatpush1.msra.mxu0 0.0
    %655 = vmatprep.subr.mxu0 0.0
    %656 = vmatpush1.msra.mxu0 0.0
    %657 = vmatprep.subr.mxu0 0.0
    %658 = vmatpush1.msra.mxu0 0.0
    %659 = vmatprep.subr.mxu0 0.0
    %660 = vmatpush1.msra.mxu0 0.0
    %661 = vmatprep.subr.mxu0 0.0
    %662 = vmatpush1.msra.mxu0 0.0
    %663 = vmatprep.subr.mxu0 0.0
    %664 = vmatpush1.msra.mxu0 0.0
    %665 = vmatprep.subr.mxu0 0.0
    %666 = vmatpush1.msra.mxu0 0.0
    %667 = vmatprep.subr.mxu0 0.0
    %668 = vmatpush1.msra.mxu0 0.0
    %669 = vmatprep.subr.mxu0 0.0
    %670 = vmatpush1.msra.mxu0 0.0
    %671 = vmatprep.mubr.f32.mxu0 0.0
    %672 = vmatmul.mubr.f32.gmra.mrb[0].mxu0 %v160
    %v673 = vpop.f32.mrb[0].mxu0
    %v674 = vadd.f32 %v605, %v673
    %v675 = vpop.f32.mrb[0].mxu0
    %676 = vdwg.mxu0
    %v677 = vadd.f32 %v593, %v674
    %v678 = vxor.u32 %v677, 2147483648
    %v679 = vmul.f32 %v678, 1.442695
    %v680 = vpow.pop %v679
    %v681 = vadd.f32 %v680, 1.0
    %v682 = vrcp.pop %v681
    %v683 = vmul.f32 1.0, %v682
    %685 = vrot.lane.b32.xlu0 %v674, 64
    %v686 = vpop.permute.xlu0 %685
    %v688 = vmul.f32 %v683, %v686
    %690 = vrot.lane.b32.xlu0 %v688, 64
    %v691 = vpop.permute.xlu0 %690
    %v693 = vadd.f32 %v593, %v691
    %v694 = vtanh.pop %v693
    %v695 = vsub.f32 1.0, %v683
    %697 = vrot.lane.b32.xlu0 %v694, 96
    %v698 = vpop.permute.xlu0 %697
    %v700 = vmul.f32 %v695, %v698
    %701 = vrot.lane.b32.xlu0 %v151, 32
    %v702 = vpop.permute.xlu0 %701
    %v704 = vmul.f32 %v683, %v702
    %v705 = vadd.f32 %v700, %v704
    %707 = vrot.lane.b32.xlu0 %v705, 96
    %v708 = vpop.permute.xlu0 %707
    %vm710 = vcmask 254976
    %711 = vst.msk [vmem:[#allocation7] sm:$0x3] %vm710, %v708
    %713 = vrot.lane.b32.xlu0 %v495, 96
    %v714 = vpop.permute.xlu0 %713
    %v716 = vsel %vm158, %v708, %v500
    %v717 = vsel %vm522, %v716, %v714
    %v718 = vpack.c.bf16 %v717, %v717
    %719 = vst [vmem:[%s12] sm:$0x1] %v718
    // Predicated region
    $region110: #{decoder_forward.2} parent=1 // pred_check
      _
    $region111: #{decoder_forward.2} parent=1 // pred_check_branch
      %721 = sbr.rel (0) target = $region113
    $region112: #{decoder_forward.2} parent=1 // pred_region
      _
    $region113: #{decoder_forward.2} parent=1 // pred_fallthru
      _
    // Predicated region
    $region114: #{decoder_forward.2} parent=1 // pred_check
      _
    $region115: #{decoder_forward.2} parent=1 // pred_check_branch
      %723 = sbr.rel (0) target = $region117
    $region116: #{decoder_forward.2} parent=1 // pred_region
      %s725 = ssub.s32 32, 32
      %726 = vsyncadd [#allocation5], %s725
      %s728 = sshll.u32 [#allocation7], 4
      %s729 = int_to_ptr.vmem [resolvable:$true] %s728
      %731 = dma.vmem_to_hbm [thread:$0]  %s729, 32, %s13, [#allocation5]
    $region117: #{decoder_forward.2} parent=1 // pred_fallthru
      _
    // Predicated region
    $region118: #{decoder_forward.2} parent=1 // pred_check
      _
    $region119: #{decoder_forward.2} parent=1 // pred_check_branch
      %733 = sbr.rel (0) target = $region121
    $region120: #{decoder_forward.2} parent=1 // pred_region
      %s735 = ssub.s32 32, 32
      %736 = vsyncadd [#allocation9], %s735
      %s738 = sshll.u32 [#allocation8], 4
      %s739 = int_to_ptr.vmem [resolvable:$true] %s738
      %741 = dma.vmem_to_hbm [thread:$0]  %s739, 32, %s14, [#allocation9]
    $region121: #{decoder_forward.2} parent=1 // pred_fallthru
      _
    // Predicated region
    $region122: #{decoder_forward.2} parent=1 // pred_check
      _
    $region123: #{decoder_forward.2} parent=1 // pred_check_branch
      %743 = sbr.rel (0) target = $region125
    $region124: #{decoder_forward.2} parent=1 // pred_region
      _
    $region125: #{decoder_forward.2} parent=1 // pred_fallthru
      _
    // Predicated region
    $region126: #{decoder_forward.2} parent=1 // pred_check
      _
    $region127: #{decoder_forward.2} parent=1 // pred_check_branch
      %745 = sbr.rel (0) target = $region129
    $region128: #{decoder_forward.2} parent=1 // pred_region
      %746 = dma.done [#allocation5], 32
    $region129: #{decoder_forward.2} parent=1 // pred_fallthru
      _
    // Predicated region
    $region130: #{decoder_forward.2} parent=1 // pred_check
      _
    $region131: #{decoder_forward.2} parent=1 // pred_check_branch
      %748 = sbr.rel (0) target = $region133
    $region132: #{decoder_forward.2} parent=1 // pred_region
      %749 = dma.done [#allocation9], 32
    $region133: #{decoder_forward.2} parent=1 // pred_fallthru
      _
    %750 = vsyncpa [#allocation5], 1
    %751 = vsyncpa [#allocation9], 1
    %752 = vsyncpa [#allocation6], 1
  %753 = vsyncmov [#allocation3]
  %s754 = vpop.sfrf %753
  %p755 = scmp.eq.s32.totalorder %s754, 0
  %p756 = pneg %p755
  %758 = shalt.err (%p756)
  %s759 = scalar_lea.sflag [#allocation3], 1
  %760 = vsyncmov %s759
  %s761 = vpop.sfrf %760
  %p762 = scmp.eq.s32.totalorder %s761, 0
  %p763 = pneg %p762
  %765 = shalt.err (%p763)

</llo_original>
